<compile_context>
chip_gen: v7x
topology: tpu7x:2x2x1
jax: 0.10.0
libtpu: 0.0.40
codegen_flags: <defaults>
</compile_context>

<pallas_src>
import numpy as np
import jax
import jax.numpy as jnp
from jax import lax
from jax.experimental import pallas as pl
from jax.experimental.pallas import tpu as pltpu

# Shapes implied by the PyTorch module (fc1 expects 16 * 13 features):
L_IN = 26            # input sequence length
C1 = 16              # conv1 / conv2 channels
L_POOL = 13          # length after MaxPool1d(k=3, s=2, p=1) on length 26
F_POOL = C1 * L_POOL # 208 real lanes, channel-major c*13 + m (== x.view(B,-1))
F_PAD = 256          # conv/pool/fc1-input lanes padded to a full lane tile
F1_OUT = 240         # fc1 real output features
F1_PAD = 256         # fc1 output lanes padded to a full lane tile
F2_OUT = 128         # fc2 output features (already lane-aligned)


def sales_cnn_kernel(x_ref, r1a_ref, r1b_ref, r1c_ref, m2_ref,
                     wf1_ref, wf2_ref, wf3_ref, bias_ref, out_ref):
    # Packed bias rows (f32), sliced statically (all offsets lane-aligned).
    b1a  = bias_ref[0:1, :]            # conv1 bias @ left pool position (m=0 pad lane zeroed)
    b1bc = bias_ref[1:2, :]            # conv1 bias @ center/right pool positions
    b2   = bias_ref[2:3, :]            # conv2 bias
    bf1  = bias_ref[3:4, :]            # fc1 bias (padded to 256)
    bf2  = bias_ref[4:5, 0:F2_OUT]     # fc2 bias
    bf3  = bias_ref[5:6, 0:1]          # fc3 bias (scalar)

    # --- conv1 at the three maxpool-window positions (exact Toeplitz matmuls) ---
    x = x_ref[...].astype(jnp.bfloat16)                                  # (TB, 26)
    za = jnp.dot(x, r1a_ref[...], preferred_element_type=jnp.float32) + b1a
    zb = jnp.dot(x, r1b_ref[...], preferred_element_type=jnp.float32) + b1bc
    zc = jnp.dot(x, r1c_ref[...], preferred_element_type=jnp.float32) + b1bc
    # MaxPool1d(k=3, s=2, p=1) fused with the pre-pool ReLU:
    #   relu(max(za, zb, zc)) == max(relu(za), relu(zb), relu(zc)).
    # INVARIANT: the m=0 "left" lane (pool padding) and all padded feature
    # lanes (>=208) are exactly 0 in za/zb/zc (zero matrix columns AND zero
    # bias); 0 <= relu(real values), so a 0-valued pad lane never wins the max.
    pooled = jnp.maximum(jnp.maximum(jnp.maximum(za, zb), zc), 0.0)      # (TB, 256)

    # --- conv2 (structured 256x256 matmul) + bias + ReLU ---------------------
    # Output lane order is o*13 + l (lanes >= 208 stay exactly 0).
    c2 = jnp.maximum(
        jnp.dot(pooled.astype(jnp.bfloat16), m2_ref[...],
                preferred_element_type=jnp.float32) + b2, 0.0)           # (TB, 256)

    # --- fc1 -> ReLU -> fc2 -> ReLU (padded lanes stay 0 by construction) ----
    f1 = jnp.maximum(
        jnp.dot(c2.astype(jnp.bfloat16), wf1_ref[...],
                preferred_element_type=jnp.float32) + bf1, 0.0)          # (TB, 256)
    f2 = jnp.maximum(
        jnp.dot(f1.astype(jnp.bfloat16), wf2_ref[...],
                preferred_element_type=jnp.float32) + bf2, 0.0)          # (TB, 128)

    # --- fc3 (N=1): contract against f2's feature dim so the result lands with
    # the batch on LANES -> lane-dense (1, TB) block, unmasked full-lane store.
    v = lax.dot_general(wf3_ref[...], f2.astype(jnp.bfloat16),
                        dimension_numbers=(((1,), (1,)), ((), ())),
                        preferred_element_type=jnp.float32)              # (1, TB)
    out_ref[0] = v + bf3


def init_torch_params(key):
    """Deterministic params with PyTorch-shaped tensors and PyTorch-like uniform init."""
    shapes = [
        ((16, 1, 3), 3), ((16,), 3),        # conv1.weight, conv1.bias
        ((16, 16, 3), 48), ((16,), 48),     # conv2.weight, conv2.bias
        ((240, 208), 208), ((240,), 208),   # fc1.weight,  fc1.bias
        ((128, 240), 240), ((128,), 240),   # fc2.weight,  fc2.bias
        ((1, 128), 128), ((1,), 128),       # fc3.weight,  fc3.bias
    ]
    keys = jax.random.split(key, len(shapes))
    params = []
    for k, (shape, fan_in) in zip(keys, shapes):
        bound = 1.0 / float(np.sqrt(fan_in))
        params.append(jax.random.uniform(k, shape, jnp.float32, -bound, bound))
    return tuple(params)


def build_kernel_params(params, matmul_dtype=jnp.bfloat16):
    """Turn PyTorch-shaped weights into the lane-padded structured matrices the kernel uses."""
    (W1, b1, W2, b2, Wf1, bf1, Wf2, bf2, Wf3, bf3) = [
        np.asarray(p, np.float32) for p in params]

    # conv1 evaluated only at the maxpool-window positions p = 2m-1, 2m, 2m+1
    # (m = pooled index): one (26 -> 256) Toeplitz matrix per window offset.
    # Lane layout c*13 + m; columns 208..255 stay zero (padding).
    R = [np.zeros((L_IN, F_PAD), np.float32) for _ in range(3)]
    for c in range(C1):
        for m in range(L_POOL):
            for w, off in enumerate((-1, 0, 1)):      # left / center / right of pool window
                p = 2 * m + off                       # conv1 output position
                if not (0 <= p < L_IN):
                    continue                          # maxpool pad lane: column stays 0
                for k in range(3):
                    i = p + k - 1                     # conv1 padding=1
                    if 0 <= i < L_IN:
                        R[w][i, c * L_POOL + m] += W1[c, 0, k]

    b1_full = np.zeros((F_PAD,), np.float32)
    b1_full[:F_POOL] = np.tile(b1[:, None], (1, L_POOL)).reshape(F_POOL)
    b1_left = b1_full.copy()
    for c in range(C1):
        # m=0 "left" position is maxpool padding -> must be exactly 0 (see kernel invariant).
        b1_left[c * L_POOL + 0] = 0.0

    # conv2 as a (256 -> 256) matrix over pooled lanes c*13 + m (padded rows/cols zero).
    M2 = np.zeros((F_PAD, F_PAD), np.float32)
    b2row = np.zeros((F_PAD,), np.float32)
    b2row[:F_POOL] = np.tile(b2[:, None], (1, L_POOL)).reshape(F_POOL)
    for o in range(C1):
        for l in range(L_POOL):
            for c in range(C1):
                for k in range(3):
                    m = l + k - 1                     # padding=1 in pooled coordinates
                    if 0 <= m < L_POOL:
                        M2[c * L_POOL + m, o * L_POOL + l] += W2[o, c, k]

    # fc1 / fc2 weights, transposed and zero-padded to full lane tiles.
    Wf1p = np.zeros((F_PAD, F1_PAD), np.float32)
    Wf1p[:F_POOL, :F1_OUT] = Wf1.T
    Wf2p = np.zeros((F1_PAD, F2_OUT), np.float32)
    Wf2p[:F1_OUT, :] = Wf2.T

    # All biases packed into one (8, 256) f32 row-stack (single pallas operand).
    biases = np.zeros((8, F_PAD), np.float32)
    biases[0, :] = b1_left
    biases[1, :] = b1_full
    biases[2, :] = b2row
    biases[3, :F1_OUT] = bf1
    biases[4, :F2_OUT] = bf2
    biases[5, 0] = bf3[0]

    md = matmul_dtype
    return (jnp.asarray(R[0], md), jnp.asarray(R[1], md), jnp.asarray(R[2], md),
            jnp.asarray(M2, md),
            jnp.asarray(Wf1p, md), jnp.asarray(Wf2p, md),
            jnp.asarray(Wf3, md),            # fc3 weight as a (1, 128) row
            jnp.asarray(biases))             # (8, 256) f32


def _round_up(n, m):
    return ((n + m - 1) // m) * m


def sales_prediction_cnn_forward(x, kernel_params, *, tb=1024):
    """Batch-tiled forward pass.

    tb is the batch tile (rows per grid step); default 1024 amortizes the
    ~0.35 us per-step pipeline overhead, clamp at 2048 keeps the per-tile
    f32 temporaries comfortably inside v7x's 64 MiB VMEM.  Weights stay
    VMEM-resident across grid steps (constant index_map -> no re-DMA).
    """
    B = x.shape[0]
    B128 = _round_up(B, 128)
    tb = int(max(128, min(_round_up(int(tb), 128), 2048)))
    tb = min(tb, B128)
    Bp = _round_up(B, tb)
    # v7x megacore: dimension_semantics=("parallel",) only helps when there are
    # >= 2 grid steps to shard across its 2 TensorCores.  Split a single tile in
    # two iff it adds no extra padding (v5e/v6e are single-TC; harmless there).
    if Bp // tb == 1 and Bp >= 256 and Bp % 256 == 0:
        tb = Bp // 2
    Bp = _round_up(B, tb)
    grid_n = Bp // tb
    if Bp != B:
        x = jnp.pad(x, ((0, Bp - B), (0, 0)))     # zero rows, sliced off below

    # All weights are 2-D with a constant index_map (stay resident in VMEM).
    weight_specs = [pl.BlockSpec(w.shape, lambda i: (0, 0)) for w in kernel_params]
    in_specs = [pl.BlockSpec((tb, L_IN), lambda i: (i, 0))] + weight_specs
    # Lane-dense output: one (1, 1, tb) block per grid step.
    out_specs = pl.BlockSpec((1, 1, tb), lambda i: (i, 0, 0))
    out_shape = jax.ShapeDtypeStruct((grid_n, 1, tb), jnp.float32)

    weight_bytes = sum(int(np.prod(w.shape)) * w.dtype.itemsize for w in kernel_params)
    flops = 2 * Bp * (3 * L_IN * F_PAD + F_PAD * F_PAD + F_PAD * F1_PAD
                      + F1_PAD * F2_OUT + F2_OUT)
    bytes_accessed = weight_bytes + Bp * L_IN * 4 + Bp * 4

    # Rough per-tile VMEM footprint: f32 temporaries (za/zb/zc/pooled/c2/f1/f2),
    # bf16 MXU copies, double-buffered x / out blocks, resident weights.
    bytes_per_row = (6 * F_PAD + F2_OUT) * 4 + (2 * F_PAD + F1_PAD + F2_OUT + L_IN) * 2
    vmem_est = tb * bytes_per_row + 2 * tb * 128 * 4 + 2 * tb * 4 + 2 * weight_bytes + (2 << 20)
    vmem_limit = min(64 * 1024 * 1024, max(32 * 1024 * 1024, 2 * vmem_est))

    out = pl.pallas_call(
        sales_cnn_kernel,
        out_shape=out_shape,
        grid=(grid_n,),
        in_specs=in_specs,
        out_specs=out_specs,
        compiler_params=pltpu.CompilerParams(
            dimension_semantics=("parallel",),
            vmem_limit_bytes=vmem_limit),
        cost_estimate=pl.CostEstimate(flops=flops, transcendentals=0,
                                      bytes_accessed=bytes_accessed),
    )(x, *kernel_params)
    return out.reshape(Bp, 1)[:B]


def reference_forward(x, params):
    """Plain numpy re-implementation of the PyTorch forward (NCL), for verification."""
    W1, b1, W2, b2, Wf1, bf1, Wf2, bf2, Wf3, bf3 = [np.asarray(p, np.float64) for p in params]
    x = np.asarray(x, np.float64)
    B = x.shape[0]
    # conv1 (padding=1) + ReLU
    xpad = np.pad(x, ((0, 0), (1, 1)))
    h1 = np.zeros((B, C1, L_IN))
    for o in range(C1):
        for l in range(L_IN):
            h1[:, o, l] = b1[o] + sum(W1[o, 0, k] * xpad[:, l + k] for k in range(3))
    h1 = np.maximum(h1, 0.0)
    # MaxPool1d(k=3, s=2, p=1) pads with -inf
    h1p = np.pad(h1, ((0, 0), (0, 0), (1, 1)), constant_values=-np.inf)
    hp = np.zeros((B, C1, L_POOL))
    for l in range(L_POOL):
        hp[:, :, l] = h1p[:, :, 2 * l:2 * l + 3].max(axis=2)
    # conv2 (padding=1) + ReLU
    hpp = np.pad(hp, ((0, 0), (0, 0), (1, 1)))
    h2 = np.zeros((B, C1, L_POOL))
    for o in range(C1):
        for l in range(L_POOL):
            acc = np.full((B,), b2[o])
            for c in range(C1):
                for k in range(3):
                    acc = acc + W2[o, c, k] * hpp[:, c, l + k]
            h2[:, o, l] = acc
    h2 = np.maximum(h2, 0.0)
    flat = h2.reshape(B, -1)            # channel-major flatten, like x.view(B, -1)
    f1 = np.maximum(flat @ Wf1.T + bf1, 0.0)
    f2 = np.maximum(f1 @ Wf2.T + bf2, 0.0)
    return f2 @ Wf3.T + bf3


if __name__ == "__main__":
    key = jax.random.PRNGKey(0)
    pkey, xkey1, xkey2 = jax.random.split(key, 3)

    params = init_torch_params(pkey)
    kparams = build_kernel_params(params)

    # Case 1: small batch (B=40) -> one 128-row tile, grid=(1,).
    x_small = jax.random.normal(xkey1, (40, L_IN), dtype=jnp.float32)
    out_small = jax.block_until_ready(sales_prediction_cnn_forward(x_small, kparams))
    ref_small = reference_forward(np.asarray(x_small), params)
    assert out_small.shape == (40, 1)
    # Tolerance sized for bf16 MXU operands (f32 accumulation); outputs are O(0.1).
    np.testing.assert_allclose(np.asarray(out_small), ref_small, rtol=2e-2, atol=2e-2)

    # Case 2: B=200 -> tb=128, grid=(2,): exercises batch tiling, tail padding and
    # the >=2-step grid that v7x needs for 2-TensorCore sharding.
    x_big = jax.random.normal(xkey2, (200, L_IN), dtype=jnp.float32)
    out_big = jax.block_until_ready(sales_prediction_cnn_forward(x_big, kparams))
    ref_big = reference_forward(np.asarray(x_big), params)
    assert out_big.shape == (200, 1)
    np.testing.assert_allclose(np.asarray(out_big), ref_big, rtol=2e-2, atol=2e-2)

    print("KERNEL_OK")
</pallas_src>

<mosaic_0001>
module attributes {stable_mosaic.version = 11 : i64} {
  func.func @sales_cnn_kernel(%arg0: i32, %arg1: memref<128x26xf32, #tpu.memory_space<vmem>>, %arg2: memref<26x256xbf16, #tpu.memory_space<vmem>>, %arg3: memref<26x256xbf16, #tpu.memory_space<vmem>>, %arg4: memref<26x256xbf16, #tpu.memory_space<vmem>>, %arg5: memref<256x256xbf16, #tpu.memory_space<vmem>>, %arg6: memref<256x256xbf16, #tpu.memory_space<vmem>>, %arg7: memref<256x128xbf16, #tpu.memory_space<vmem>>, %arg8: memref<1x128xbf16, #tpu.memory_space<vmem>>, %arg9: memref<8x256xf32, #tpu.memory_space<vmem>>, %arg10: memref<1x1x128xf32, #tpu.memory_space<vmem>>) attributes {dimension_semantics = [#tpu.dimension_semantics<parallel>], iteration_bounds = array<i64: 1>, scalar_prefetch = 0 : i64, scratch_operands = 0 : i64, tpu.core_type = #tpu.core_type<tc>, window_params = [{transform_indices = @transform_0, window_bounds = array<i64: 128, 26>}, {pipeline_mode = #tpu.pipeline_mode<synchronous>, transform_indices = @transform_1, window_bounds = array<i64: 26, 256>}, {pipeline_mode = #tpu.pipeline_mode<synchronous>, transform_indices = @transform_2, window_bounds = array<i64: 26, 256>}, {pipeline_mode = #tpu.pipeline_mode<synchronous>, transform_indices = @transform_3, window_bounds = array<i64: 26, 256>}, {pipeline_mode = #tpu.pipeline_mode<synchronous>, transform_indices = @transform_4, window_bounds = array<i64: 256, 256>}, {pipeline_mode = #tpu.pipeline_mode<synchronous>, transform_indices = @transform_5, window_bounds = array<i64: 256, 256>}, {pipeline_mode = #tpu.pipeline_mode<synchronous>, transform_indices = @transform_6, window_bounds = array<i64: 256, 128>}, {pipeline_mode = #tpu.pipeline_mode<synchronous>, transform_indices = @transform_7, window_bounds = array<i64: 1, 128>}, {pipeline_mode = #tpu.pipeline_mode<synchronous>, transform_indices = @transform_8, window_bounds = array<i64: 8, 256>}, {transform_indices = @transform_9, window_bounds = array<i64: 1, 1, 128>}]} {
    %c0 = arith.constant 0 : index
    %c0_0 = arith.constant 0 : index
    %0 = vector.load %arg9[%c0, %c0_0] : memref<8x256xf32, #tpu.memory_space<vmem>>, vector<1x256xf32>
    %c1 = arith.constant 1 : index
    %c0_1 = arith.constant 0 : index
    %1 = vector.load %arg9[%c1, %c0_1] : memref<8x256xf32, #tpu.memory_space<vmem>>, vector<1x256xf32>
    %c2 = arith.constant 2 : index
    %c0_2 = arith.constant 0 : index
    %2 = vector.load %arg9[%c2, %c0_2] : memref<8x256xf32, #tpu.memory_space<vmem>>, vector<1x256xf32>
    %c3 = arith.constant 3 : index
    %c0_3 = arith.constant 0 : index
    %3 = vector.load %arg9[%c3, %c0_3] : memref<8x256xf32, #tpu.memory_space<vmem>>, vector<1x256xf32>
    %c4 = arith.constant 4 : index
    %c0_4 = arith.constant 0 : index
    %4 = vector.load %arg9[%c4, %c0_4] : memref<8x256xf32, #tpu.memory_space<vmem>>, vector<1x128xf32>
    %c5 = arith.constant 5 : index
    %c0_5 = arith.constant 0 : index
    %5 = vector.load %arg9[%c5, %c0_5] : memref<8x256xf32, #tpu.memory_space<vmem>>, vector<1x1xf32>
    %c0_6 = arith.constant 0 : index
    %c0_7 = arith.constant 0 : index
    %6 = vector.load %arg1[%c0_6, %c0_7] : memref<128x26xf32, #tpu.memory_space<vmem>>, vector<128x26xf32>
    %7 = arith.truncf %6 : vector<128x26xf32> to vector<128x26xbf16>
    %c0_8 = arith.constant 0 : index
    %c0_9 = arith.constant 0 : index
    %8 = vector.load %arg2[%c0_8, %c0_9] : memref<26x256xbf16, #tpu.memory_space<vmem>>, vector<26x256xbf16>
    %cst = arith.constant dense<0.000000e+00> : vector<128x256xf32>
    %9 = tpu.matmul %7, %8, %cst {dimension_numbers = #tpu.dot_dimension_numbers<[1], [0], [0], [1], [0, 0, 1, 1], [], []>} : vector<128x26xbf16>, vector<26x256xbf16>, vector<128x256xf32> -> vector<128x256xf32>
    %10 = vector.broadcast %0 : vector<1x256xf32> to vector<128x256xf32>
    %11 = arith.addf %9, %10 : vector<128x256xf32>
    %c0_10 = arith.constant 0 : index
    %c0_11 = arith.constant 0 : index
    %12 = vector.load %arg3[%c0_10, %c0_11] : memref<26x256xbf16, #tpu.memory_space<vmem>>, vector<26x256xbf16>
    %cst_12 = arith.constant dense<0.000000e+00> : vector<128x256xf32>
    %13 = tpu.matmul %7, %12, %cst_12 {dimension_numbers = #tpu.dot_dimension_numbers<[1], [0], [0], [1], [0, 0, 1, 1], [], []>} : vector<128x26xbf16>, vector<26x256xbf16>, vector<128x256xf32> -> vector<128x256xf32>
    %14 = vector.broadcast %1 : vector<1x256xf32> to vector<128x256xf32>
    %15 = arith.addf %13, %14 : vector<128x256xf32>
    %c0_13 = arith.constant 0 : index
    %c0_14 = arith.constant 0 : index
    %16 = vector.load %arg4[%c0_13, %c0_14] : memref<26x256xbf16, #tpu.memory_space<vmem>>, vector<26x256xbf16>
    %cst_15 = arith.constant dense<0.000000e+00> : vector<128x256xf32>
    %17 = tpu.matmul %7, %16, %cst_15 {dimension_numbers = #tpu.dot_dimension_numbers<[1], [0], [0], [1], [0, 0, 1, 1], [], []>} : vector<128x26xbf16>, vector<26x256xbf16>, vector<128x256xf32> -> vector<128x256xf32>
    %18 = vector.broadcast %1 : vector<1x256xf32> to vector<128x256xf32>
    %19 = arith.addf %17, %18 : vector<128x256xf32>
    %20 = arith.maximumf %11, %15 : vector<128x256xf32>
    %21 = arith.maximumf %20, %19 : vector<128x256xf32>
    %cst_16 = arith.constant 0.000000e+00 : f32
    %22 = vector.broadcast %cst_16 : f32 to vector<128x256xf32>
    %23 = arith.maximumf %21, %22 : vector<128x256xf32>
    %24 = arith.truncf %23 : vector<128x256xf32> to vector<128x256xbf16>
    %c0_17 = arith.constant 0 : index
    %c0_18 = arith.constant 0 : index
    %25 = vector.load %arg5[%c0_17, %c0_18] : memref<256x256xbf16, #tpu.memory_space<vmem>>, vector<256x256xbf16>
    %cst_19 = arith.constant dense<0.000000e+00> : vector<128x256xf32>
    %26 = tpu.matmul %24, %25, %cst_19 {dimension_numbers = #tpu.dot_dimension_numbers<[1], [0], [0], [1], [0, 0, 1, 1], [], []>} : vector<128x256xbf16>, vector<256x256xbf16>, vector<128x256xf32> -> vector<128x256xf32>
    %27 = vector.broadcast %2 : vector<1x256xf32> to vector<128x256xf32>
    %28 = arith.addf %26, %27 : vector<128x256xf32>
    %cst_20 = arith.constant 0.000000e+00 : f32
    %29 = vector.broadcast %cst_20 : f32 to vector<128x256xf32>
    %30 = arith.maximumf %28, %29 : vector<128x256xf32>
    %31 = arith.truncf %30 : vector<128x256xf32> to vector<128x256xbf16>
    %c0_21 = arith.constant 0 : index
    %c0_22 = arith.constant 0 : index
    %32 = vector.load %arg6[%c0_21, %c0_22] : memref<256x256xbf16, #tpu.memory_space<vmem>>, vector<256x256xbf16>
    %cst_23 = arith.constant dense<0.000000e+00> : vector<128x256xf32>
    %33 = tpu.matmul %31, %32, %cst_23 {dimension_numbers = #tpu.dot_dimension_numbers<[1], [0], [0], [1], [0, 0, 1, 1], [], []>} : vector<128x256xbf16>, vector<256x256xbf16>, vector<128x256xf32> -> vector<128x256xf32>
    %34 = vector.broadcast %3 : vector<1x256xf32> to vector<128x256xf32>
    %35 = arith.addf %33, %34 : vector<128x256xf32>
    %cst_24 = arith.constant 0.000000e+00 : f32
    %36 = vector.broadcast %cst_24 : f32 to vector<128x256xf32>
    %37 = arith.maximumf %35, %36 : vector<128x256xf32>
    %38 = arith.truncf %37 : vector<128x256xf32> to vector<128x256xbf16>
    %c0_25 = arith.constant 0 : index
    %c0_26 = arith.constant 0 : index
    %39 = vector.load %arg7[%c0_25, %c0_26] : memref<256x128xbf16, #tpu.memory_space<vmem>>, vector<256x128xbf16>
    %cst_27 = arith.constant dense<0.000000e+00> : vector<128x128xf32>
    %40 = tpu.matmul %38, %39, %cst_27 {dimension_numbers = #tpu.dot_dimension_numbers<[1], [0], [0], [1], [0, 0, 1, 1], [], []>} : vector<128x256xbf16>, vector<256x128xbf16>, vector<128x128xf32> -> vector<128x128xf32>
    %41 = vector.broadcast %4 : vector<1x128xf32> to vector<128x128xf32>
    %42 = arith.addf %40, %41 : vector<128x128xf32>
    %cst_28 = arith.constant 0.000000e+00 : f32
    %43 = vector.broadcast %cst_28 : f32 to vector<128x128xf32>
    %44 = arith.maximumf %42, %43 : vector<128x128xf32>
    %c0_29 = arith.constant 0 : index
    %c0_30 = arith.constant 0 : index
    %45 = vector.load %arg8[%c0_29, %c0_30] : memref<1x128xbf16, #tpu.memory_space<vmem>>, vector<1x128xbf16>
    %46 = arith.truncf %44 : vector<128x128xf32> to vector<128x128xbf16>
    %cst_31 = arith.constant dense<0.000000e+00> : vector<1x128xf32>
    %47 = tpu.matmul %45, %46, %cst_31 {dimension_numbers = #tpu.dot_dimension_numbers<[1], [1], [0], [0], [0, 0, 1, 0], [], []>} : vector<1x128xbf16>, vector<128x128xbf16>, vector<1x128xf32> -> vector<1x128xf32>
    %48 = vector.broadcast %5 : vector<1x1xf32> to vector<1x128xf32>
    %49 = arith.addf %47, %48 : vector<1x128xf32>
    %c0_32 = arith.constant 0 : index
    %c0_33 = arith.constant 0 : index
    %c0_34 = arith.constant 0 : index
    %50 = vector.load %arg10[%c0_32, %c0_33, %c0_34] : memref<1x1x128xf32, #tpu.memory_space<vmem>>, vector<1x1x128xf32>
    %51 = vector.shape_cast %50 : vector<1x1x128xf32> to vector<1x128xf32>
    %52 = vector.shape_cast %49 : vector<1x128xf32> to vector<1x1x128xf32>
    tpu.vector_store %arg10[%c0_32, %c0_33, %c0_34], %52 {strides = array<i32>} : memref<1x1x128xf32, #tpu.memory_space<vmem>>, vector<1x1x128xf32>,
    return
  }
  func.func @transform_0(%arg0: i32) -> (i32, i32) {
    %c0_i32 = arith.constant 0 : i32
    %c0_i32_0 = arith.constant 0 : i32
    return %arg0, %c0_i32 : i32, i32
  }
  func.func @transform_1(%arg0: i32) -> (i32, i32) {
    %c0_i32 = arith.constant 0 : i32
    %c0_i32_0 = arith.constant 0 : i32
    %c0_i32_1 = arith.constant 0 : i32
    return %c0_i32, %c0_i32_0 : i32, i32
  }
  func.func @transform_2(%arg0: i32) -> (i32, i32) {
    %c0_i32 = arith.constant 0 : i32
    %c0_i32_0 = arith.constant 0 : i32
    %c0_i32_1 = arith.constant 0 : i32
    return %c0_i32, %c0_i32_0 : i32, i32
  }
  func.func @transform_3(%arg0: i32) -> (i32, i32) {
    %c0_i32 = arith.constant 0 : i32
    %c0_i32_0 = arith.constant 0 : i32
    %c0_i32_1 = arith.constant 0 : i32
    return %c0_i32, %c0_i32_0 : i32, i32
  }
  func.func @transform_4(%arg0: i32) -> (i32, i32) {
    %c0_i32 = arith.constant 0 : i32
    %c0_i32_0 = arith.constant 0 : i32
    %c0_i32_1 = arith.constant 0 : i32
    return %c0_i32, %c0_i32_0 : i32, i32
  }
  func.func @transform_5(%arg0: i32) -> (i32, i32) {
    %c0_i32 = arith.constant 0 : i32
    %c0_i32_0 = arith.constant 0 : i32
    %c0_i32_1 = arith.constant 0 : i32
    return %c0_i32, %c0_i32_0 : i32, i32
  }
  func.func @transform_6(%arg0: i32) -> (i32, i32) {
    %c0_i32 = arith.constant 0 : i32
    %c0_i32_0 = arith.constant 0 : i32
    %c0_i32_1 = arith.constant 0 : i32
    return %c0_i32, %c0_i32_0 : i32, i32
  }
  func.func @transform_7(%arg0: i32) -> (i32, i32) {
    %c0_i32 = arith.constant 0 : i32
    %c0_i32_0 = arith.constant 0 : i32
    %c0_i32_1 = arith.constant 0 : i32
    return %c0_i32, %c0_i32_0 : i32, i32
  }
  func.func @transform_8(%arg0: i32) -> (i32, i32) {
    %c0_i32 = arith.constant 0 : i32
    %c0_i32_0 = arith.constant 0 : i32
    %c0_i32_1 = arith.constant 0 : i32
    return %c0_i32, %c0_i32_0 : i32, i32
  }
  func.func @transform_9(%arg0: i32) -> (i32, i32, i32) {
    %c0_i32 = arith.constant 0 : i32
    %c0_i32_0 = arith.constant 0 : i32
    %c0_i32_1 = arith.constant 0 : i32
    return %arg0, %c0_i32, %c0_i32_0 : i32, i32, i32
  }
}

</mosaic_0001>

<llo_original>
// kernel: tpu_custom_call.1
$region0: #{tpu_custom_call.1}
  #allocation0 [shape = 'u32[]', space=smem, size = 0x4, offset = 0x4, fixed_abs, tag = 'smem constant byte address 0x4 - core index']
  #allocation1 [shape = 'u32[144,128]{1,0:T(1,128)}', space=vmem, size = 0x12000, scoped, tag = 'internal scratch']
  %s0 = inlined_call_operand.vmem [shape: f32[128,26], index: 0, kind: input, shape index: {}]
  %s1 = inlined_call_operand.vmem [shape: bf16[26,256], index: 1, kind: input, shape index: {}]
  %s2 = inlined_call_operand.hbm [shape: bf16[26,256], index: 2, kind: input, shape index: {}]
  %s3 = inlined_call_operand.hbm [shape: bf16[26,256], index: 3, kind: input, shape index: {}]
  %s4 = inlined_call_operand.hbm [shape: bf16[256,256], index: 4, kind: input, shape index: {}]
  %s5 = inlined_call_operand.hbm [shape: bf16[256,256], index: 5, kind: input, shape index: {}]
  %s6 = inlined_call_operand.vmem [shape: bf16[256,128], index: 6, kind: input, shape index: {}]
  %s7 = inlined_call_operand.vmem [shape: bf16[1,128], index: 7, kind: input, shape index: {}]
  %s8 = inlined_call_operand.vmem [shape: f32[8,256], index: 8, kind: input, shape index: {}]
  %s9 = inlined_call_operand.hbm [shape: f32[1,1,128], index: 9, kind: output, shape index: {}]
  %s10 = sld [smem:[#allocation0]]
  $region62: #{tpu_custom_call.1} parent=0
    _
  %s12 = ssub.s32 1, %s10
  %s13 = scalar_select 0, %s12, %s10
  $region1: #{tpu_custom_call.1} parent=0
    #allocation2 [shape = 'u8[16384]{0}', space=vmem, size = 0x4000, scoped, tag = 'input window, operand 2, single buffered']
    #allocation3 [shape = 's32[1]{0}', space=sflag, size = 0x4, scoped, tag = 'scoped memory for tpu_custom_call.1']
    #allocation4 [shape = 's32[1]{0}', space=sflag, size = 0x4, scoped, tag = 'scoped memory for tpu_custom_call.1']
    #allocation5 [shape = 'u8[16384]{0}', space=vmem, size = 0x4000, scoped, tag = 'input window, operand 3, single buffered']
    #allocation6 [shape = 's32[1]{0}', space=sflag, size = 0x4, scoped, tag = 'scoped memory for tpu_custom_call.1']
    #allocation7 [shape = 'u8[131072]{0}', space=vmem, size = 0x20000, scoped, tag = 'input window, operand 4, single buffered']
    #allocation8 [shape = 'u8[131072]{0}', space=vmem, size = 0x20000, scoped, tag = 'input window, operand 5, single buffered']
    #allocation9 [shape = 's32[1]{0}', space=sflag, size = 0x4, scoped, tag = 'scoped memory for tpu_custom_call.1']
    #allocation10 [shape = 'u8[512]{0}', space=vmem, size = 0x400, scoped, tag = 'output window, operand 0, single buffered']
    %14 = vsyncpa [#allocation3], 0
    %15 = vsyncpa [#allocation6], 0
    %16 = vsyncpa [#allocation9], 0
    %17 = vsyncpa [#allocation4], 0
    // Predicated region
    $region2: #{tpu_custom_call.1} parent=1 // pred_check
      _
    $region3: #{tpu_custom_call.1} parent=1 // pred_check_branch
      %19 = sbr.rel (0) target = $region5
    $region4: #{tpu_custom_call.1} parent=1 // pred_region
      _
    $region5: #{tpu_custom_call.1} parent=1 // pred_fallthru
      _
    // Predicated region
    $region6: #{tpu_custom_call.1} parent=1 // pred_check
      _
    $region7: #{tpu_custom_call.1} parent=1 // pred_check_branch
      %21 = sbr.rel (0) target = $region9
    $region8: #{tpu_custom_call.1} parent=1 // pred_region
      _
    $region9: #{tpu_custom_call.1} parent=1 // pred_fallthru
      _
    // Predicated region
    $region10: #{tpu_custom_call.1} parent=1 // pred_check
      _
    $region11: #{tpu_custom_call.1} parent=1 // pred_check_branch
      %23 = sbr.rel (0) target = $region13
    $region12: #{tpu_custom_call.1} parent=1 // pred_region
      %s25 = ssub.s32 512, 512
      %26 = vsyncadd [#allocation3], %s25
      %s27 = sshll.u32 [#allocation2], 4
      %s28 = int_to_ptr.vmem [resolvable:$true] %s27
      %33 = dma.hbm_to_vmem [thread:$0]  %s2, 512, %s28, [#allocation3], 128, 128, 8
    $region13: #{tpu_custom_call.1} parent=1 // pred_fallthru
      _
    // Predicated region
    $region14: #{tpu_custom_call.1} parent=1 // pred_check
      _
    $region15: #{tpu_custom_call.1} parent=1 // pred_check_branch
      %35 = sbr.rel (0) target = $region17
    $region16: #{tpu_custom_call.1} parent=1 // pred_region
      %s37 = ssub.s32 512, 512
      %38 = vsyncadd [#allocation6], %s37
      %s39 = sshll.u32 [#allocation5], 4
      %s40 = int_to_ptr.vmem [resolvable:$true] %s39
      %45 = dma.hbm_to_vmem [thread:$0]  %s3, 512, %s40, [#allocation6], 128, 128, 8
    $region17: #{tpu_custom_call.1} parent=1 // pred_fallthru
      _
    // Predicated region
    $region18: #{tpu_custom_call.1} parent=1 // pred_check
      _
    $region19: #{tpu_custom_call.1} parent=1 // pred_check_branch
      %47 = sbr.rel (0) target = $region21
    $region20: #{tpu_custom_call.1} parent=1 // pred_region
      %s49 = ssub.s32 4096, 4096
      %50 = vsyncadd [#allocation6], %s49
      %s51 = sshll.u32 [#allocation7], 4
      %s52 = int_to_ptr.vmem [resolvable:$true] %s51
      %57 = dma.hbm_to_vmem [thread:$0]  %s4, 4096, %s52, [#allocation6], 128, 128, 8
    $region21: #{tpu_custom_call.1} parent=1 // pred_fallthru
      _
    // Predicated region
    $region22: #{tpu_custom_call.1} parent=1 // pred_check
      _
    $region23: #{tpu_custom_call.1} parent=1 // pred_check_branch
      %59 = sbr.rel (0) target = $region25
    $region24: #{tpu_custom_call.1} parent=1 // pred_region
      %s61 = ssub.s32 4096, 4096
      %62 = vsyncadd [#allocation9], %s61
      %s63 = sshll.u32 [#allocation8], 4
      %s64 = int_to_ptr.vmem [resolvable:$true] %s63
      %69 = dma.hbm_to_vmem [thread:$0]  %s5, 4096, %s64, [#allocation9], 128, 128, 8
    $region25: #{tpu_custom_call.1} parent=1 // pred_fallthru
      _
    // Predicated region
    $region26: #{tpu_custom_call.1} parent=1 // pred_check
      _
    $region27: #{tpu_custom_call.1} parent=1 // pred_check_branch
      %71 = sbr.rel (0) target = $region29
    $region28: #{tpu_custom_call.1} parent=1 // pred_region
      _
    $region29: #{tpu_custom_call.1} parent=1 // pred_fallthru
      _
    // Predicated region
    $region30: #{tpu_custom_call.1} parent=1 // pred_check
      _
    $region31: #{tpu_custom_call.1} parent=1 // pred_check_branch
      %73 = sbr.rel (0) target = $region33
    $region32: #{tpu_custom_call.1} parent=1 // pred_region
      _
    $region33: #{tpu_custom_call.1} parent=1 // pred_fallthru
      _
    // Predicated region
    $region34: #{tpu_custom_call.1} parent=1 // pred_check
      _
    $region35: #{tpu_custom_call.1} parent=1 // pred_check_branch
      %75 = sbr.rel (0) target = $region37
    $region36: #{tpu_custom_call.1} parent=1 // pred_region
      _
    $region37: #{tpu_custom_call.1} parent=1 // pred_fallthru
      _
    // Predicated region
    $region38: #{tpu_custom_call.1} parent=1 // pred_check
      _
    $region39: #{tpu_custom_call.1} parent=1 // pred_check_branch
      %77 = sbr.rel (0) target = $region41
    $region40: #{tpu_custom_call.1} parent=1 // pred_region
      %78 = dma.done [#allocation3], 512
    $region41: #{tpu_custom_call.1} parent=1 // pred_fallthru
      _
    // Predicated region
    $region42: #{tpu_custom_call.1} parent=1 // pred_check
      _
    $region43: #{tpu_custom_call.1} parent=1 // pred_check_branch
      %80 = sbr.rel (0) target = $region45
    $region44: #{tpu_custom_call.1} parent=1 // pred_region
      %81 = dma.done [#allocation6], 512
    $region45: #{tpu_custom_call.1} parent=1 // pred_fallthru
      _
    // Predicated region
    $region46: #{tpu_custom_call.1} parent=1 // pred_check
      _
    $region47: #{tpu_custom_call.1} parent=1 // pred_check_branch
      %83 = sbr.rel (0) target = $region49
    $region48: #{tpu_custom_call.1} parent=1 // pred_region
      %84 = dma.done [#allocation6], 4096
    $region49: #{tpu_custom_call.1} parent=1 // pred_fallthru
      _
    // Predicated region
    $region50: #{tpu_custom_call.1} parent=1 // pred_check
      _
    $region51: #{tpu_custom_call.1} parent=1 // pred_check_branch
      %86 = sbr.rel (0) target = $region53
    $region52: #{tpu_custom_call.1} parent=1 // pred_region
      %87 = dma.done [#allocation9], 4096
    $region53: #{tpu_custom_call.1} parent=1 // pred_fallthru
      _
    %v89 = vld [vmem:[%s8] ss:$8 sm:$0x3]
    %s90 = scalar_lea.vmem %s8, 1
    %v91 = vld [vmem:[%s90] ss:$8 sm:$0x3]
    %s92 = scalar_lea.vmem %s8, 2
    %v93 = vld [vmem:[%s92] ss:$8 sm:$0x3]
    %s94 = scalar_lea.vmem %s8, 3
    %v95 = vld [vmem:[%s94] ss:$8 sm:$0x3]
    %v96 = vld [vmem:[%s8 + $0x4] ss:$0 sm:$0xff]
    %v97 = vld [vmem:[%s8 + $0x5] ss:$0 sm:$0xff]
    %v98 = vld [vmem:[%s0] sm:$0xff]
    %v99 = vld [vmem:[%s0 + $0x8] sm:$0xff]
    %v100 = vld [vmem:[%s0 + $0x10] sm:$0xff]
    %v101 = vld [vmem:[%s0 + $0x18] sm:$0xff]
    %v102 = vld [vmem:[%s0 + $0x20] sm:$0xff]
    %v103 = vld [vmem:[%s0 + $0x28] sm:$0xff]
    %v104 = vld [vmem:[%s0 + $0x30] sm:$0xff]
    %v105 = vld [vmem:[%s0 + $0x38] sm:$0xff]
    %v106 = vld [vmem:[%s0 + $0x40] sm:$0xff]
    %v107 = vld [vmem:[%s0 + $0x48] sm:$0xff]
    %v108 = vld [vmem:[%s0 + $0x50] sm:$0xff]
    %v109 = vld [vmem:[%s0 + $0x58] sm:$0xff]
    %v110 = vld [vmem:[%s0 + $0x60] sm:$0xff]
    %v111 = vld [vmem:[%s0 + $0x68] sm:$0xff]
    %v112 = vld [vmem:[%s0 + $0x70] sm:$0xff]
    %v113 = vld [vmem:[%s0 + $0x78] sm:$0xff]
    %v114 = vpack.c.bf16 %v99, %v98
    %v115 = vpack.c.bf16 %v101, %v100
    %v116 = vpack.c.bf16 %v103, %v102
    %v117 = vpack.c.bf16 %v105, %v104
    %v118 = vpack.c.bf16 %v107, %v106
    %v119 = vpack.c.bf16 %v109, %v108
    %v120 = vpack.c.bf16 %v111, %v110
    %v121 = vpack.c.bf16 %v113, %v112
    %v122 = vld [vmem:[%s1] sm:$0xff]
    %v123 = vld [vmem:[%s1 + $0x8] sm:$0xff]
    %v124 = vld [vmem:[%s1 + $0x10] sm:$0xff]
    %v125 = vld [vmem:[%s1 + $0x18] sm:$0x11]
    %v127 = vlaneseq
    %v128 = vshrl.u32 %v127, 7
    %v129 = vsub.s32 0, %v128
    %v130 = vrot.slane %v89, %v129
    %v131 = vlaneseq
    %v132 = vshrl.u32 %v131, 7
    %v133 = vsub.s32 1, %v132
    %v134 = vrot.slane %v89, %v133
    %v141 = vunpack.c.l.b16 %v122
    %v142 = vunpack.c.h.b16 %v122
    %v143 = vunpack.c.l.b16 %v123
    %v144 = vunpack.c.h.b16 %v123
    %v145 = vunpack.c.l.b16 %v124
    %v146 = vunpack.c.h.b16 %v124
    %v147 = vunpack.c.l.b16 %v125
    %v148 = vunpack.c.h.b16 %v125
    %v149 = vpack.c.b16 %v143, %v141
    %v150 = vpack.c.b16 %v144, %v142
    %v151 = vpack.c.b16 %v147, %v145
    %v152 = vpack.c.b16 %v148, %v146
    %vm155 = vcmask 211968
    %v157 = vsel %vm155, %v114, 0
    %v160 = vsel %vm155, %v115, 0
    %v163 = vsel %vm155, %v116, 0
    %v166 = vsel %vm155, %v117, 0
    %v169 = vsel %vm155, %v118, 0
    %v172 = vsel %vm155, %v119, 0
    %v175 = vsel %vm155, %v120, 0
    %v178 = vsel %vm155, %v121, 0
    %vm180 = vcmask 1044480
    %v182 = vsel %vm180, %v151, 0
    %v185 = vsel %vm180, %v152, 0
    %187 = vmatprep.subr.bf16.mxu0 %v150
    %188 = vmatpush1.bf16.msra.mxu0 %v149
    %189 = vmatprep.subr.bf16.mxu0 %v185
    %190 = vmatpush1.bf16.msra.mxu0 %v182
    %191 = vmatprep.subr.bf16.mxu0 0
    %192 = vmatpush1.bf16.msra.mxu0 0
    %193 = vmatprep.subr.bf16.mxu0 0
    %194 = vmatpush1.bf16.msra.mxu0 0
    %195 = vmatprep.subr.bf16.mxu0 0
    %196 = vmatpush1.bf16.msra.mxu0 0
    %197 = vmatprep.subr.bf16.mxu0 0
    %198 = vmatpush1.bf16.msra.mxu0 0
    %199 = vmatprep.subr.bf16.mxu0 0
    %200 = vmatpush1.bf16.msra.mxu0 0
    %201 = vmatprep.subr.bf16.mxu0 0
    %202 = vmatpush1.bf16.msra.mxu0 0
    %203 = vmatprep.subr.bf16.mxu0 0
    %204 = vmatpush1.bf16.msra.mxu0 0
    %205 = vmatprep.subr.bf16.mxu0 0
    %206 = vmatpush1.bf16.msra.mxu0 0
    %207 = vmatprep.subr.bf16.mxu0 0
    %208 = vmatpush1.bf16.msra.mxu0 0
    %209 = vmatprep.subr.bf16.mxu0 0
    %210 = vmatpush1.bf16.msra.mxu0 0
    %211 = vmatprep.subr.bf16.mxu0 0
    %212 = vmatpush1.bf16.msra.mxu0 0
    %213 = vmatprep.subr.bf16.mxu0 0
    %214 = vmatpush1.bf16.msra.mxu0 0
    %215 = vmatprep.subr.bf16.mxu0 0
    %216 = vmatpush1.bf16.msra.mxu0 0
    %217 = vmatprep.subr.bf16.mxu0 0
    %218 = vmatpush1.bf16.msra.mxu0 0
    %219 = vmatprep.mubr.bf16.mxu0 0
    %220 = vmatmul.mubr.bf16.gmra.mrb[0].mxu0 %v157
    %v221 = vpop.f32.mrb[0].mxu0
    %v222 = vadd.f32 %v130, %v221
    %v223 = vpop.f32.mrb[0].mxu0
    %v224 = vadd.f32 %v134, %v223
    %v225 = vpop.f32.mrb[0].mxu0
    %v226 = vadd.f32 %v130, %v225
    %v227 = vpop.f32.mrb[0].mxu0
    %v228 = vadd.f32 %v134, %v227
    %229 = vmatprep.mubr.bf16.mxu0 0
    %230 = vmatmul.mubr.bf16.gmra.mrb[0].mxu0 %v160
    %v231 = vpop.f32.mrb[0].mxu0
    %v232 = vadd.f32 %v130, %v231
    %v233 = vpop.f32.mrb[0].mxu0
    %v234 = vadd.f32 %v134, %v233
    %v235 = vpop.f32.mrb[0].mxu0
    %v236 = vadd.f32 %v130, %v235
    %v237 = vpop.f32.mrb[0].mxu0
    %v238 = vadd.f32 %v134, %v237
    %239 = vmatprep.mubr.bf16.mxu0 0
    %240 = vmatmul.mubr.bf16.gmra.mrb[0].mxu0 %v163
    %v241 = vpop.f32.mrb[0].mxu0
    %v242 = vadd.f32 %v130, %v241
    %v243 = vpop.f32.mrb[0].mxu0
    %v244 = vadd.f32 %v134, %v243
    %v245 = vpop.f32.mrb[0].mxu0
    %v246 = vadd.f32 %v130, %v245
    %v247 = vpop.f32.mrb[0].mxu0
    %v248 = vadd.f32 %v134, %v247
    %249 = vmatprep.mubr.bf16.mxu0 0
    %250 = vmatmul.mubr.bf16.gmra.mrb[0].mxu0 %v166
    %v251 = vpop.f32.mrb[0].mxu0
    %v252 = vadd.f32 %v130, %v251
    %v253 = vpop.f32.mrb[0].mxu0
    %v254 = vadd.f32 %v134, %v253
    %v255 = vpop.f32.mrb[0].mxu0
    %v256 = vadd.f32 %v130, %v255
    %v257 = vpop.f32.mrb[0].mxu0
    %v258 = vadd.f32 %v134, %v257
    %259 = vmatprep.mubr.bf16.mxu0 0
    %260 = vmatmul.mubr.bf16.gmra.mrb[0].mxu0 %v169
    %v261 = vpop.f32.mrb[0].mxu0
    %v262 = vadd.f32 %v130, %v261
    %v263 = vpop.f32.mrb[0].mxu0
    %v264 = vadd.f32 %v134, %v263
    %v265 = vpop.f32.mrb[0].mxu0
    %v266 = vadd.f32 %v130, %v265
    %v267 = vpop.f32.mrb[0].mxu0
    %v268 = vadd.f32 %v134, %v267
    %269 = vmatprep.mubr.bf16.mxu0 0
    %270 = vmatmul.mubr.bf16.gmra.mrb[0].mxu0 %v172
    %v271 = vpop.f32.mrb[0].mxu0
    %v272 = vadd.f32 %v130, %v271
    %v273 = vpop.f32.mrb[0].mxu0
    %v274 = vadd.f32 %v134, %v273
    %v275 = vpop.f32.mrb[0].mxu0
    %v276 = vadd.f32 %v130, %v275
    %v277 = vpop.f32.mrb[0].mxu0
    %v278 = vadd.f32 %v134, %v277
    %279 = vmatprep.mubr.bf16.mxu0 0
    %280 = vmatmul.mubr.bf16.gmra.mrb[0].mxu0 %v175
    %v281 = vpop.f32.mrb[0].mxu0
    %v282 = vadd.f32 %v130, %v281
    %v283 = vpop.f32.mrb[0].mxu0
    %v284 = vadd.f32 %v134, %v283
    %v285 = vpop.f32.mrb[0].mxu0
    %v286 = vadd.f32 %v130, %v285
    %v287 = vpop.f32.mrb[0].mxu0
    %v288 = vadd.f32 %v134, %v287
    %289 = vmatprep.mubr.bf16.mxu0 0
    %290 = vmatmul.mubr.bf16.gmra.mrb[0].mxu0 %v178
    %v291 = vpop.f32.mrb[0].mxu0
    %v292 = vadd.f32 %v130, %v291
    %v293 = vpop.f32.mrb[0].mxu0
    %v294 = vadd.f32 %v134, %v293
    %v295 = vpop.f32.mrb[0].mxu0
    %v296 = vadd.f32 %v130, %v295
    %v297 = vpop.f32.mrb[0].mxu0
    %v298 = vadd.f32 %v134, %v297
    %299 = vdwg.mxu0
    %v300 = vld [vmem:[#allocation2] sm:$0xff]
    %v301 = vld [vmem:[#allocation2 + $0x8] sm:$0xff]
    %v302 = vld [vmem:[#allocation2 + $0x10] sm:$0xff]
    %v303 = vld [vmem:[#allocation2 + $0x18] sm:$0x11]
    %v305 = vlaneseq
    %v306 = vshrl.u32 %v305, 7
    %v307 = vsub.s32 0, %v306
    %v308 = vrot.slane %v91, %v307
    %v309 = vlaneseq
    %v310 = vshrl.u32 %v309, 7
    %v311 = vsub.s32 1, %v310
    %v312 = vrot.slane %v91, %v311
    %v319 = vunpack.c.l.b16 %v300
    %v320 = vunpack.c.h.b16 %v300
    %v321 = vunpack.c.l.b16 %v301
    %v322 = vunpack.c.h.b16 %v301
    %v323 = vunpack.c.l.b16 %v302
    %v324 = vunpack.c.h.b16 %v302
    %v325 = vunpack.c.l.b16 %v303
    %v326 = vunpack.c.h.b16 %v303
    %v327 = vpack.c.b16 %v321, %v319
    %v328 = vpack.c.b16 %v322, %v320
    %v329 = vpack.c.b16 %v325, %v323
    %v330 = vpack.c.b16 %v326, %v324
    %v334 = vsel %vm180, %v329, 0
    %v337 = vsel %vm180, %v330, 0
    %339 = vmatprep.subr.bf16.mxu0 %v328
    %340 = vmatpush1.bf16.msra.mxu0 %v327
    %341 = vmatprep.subr.bf16.mxu0 %v337
    %342 = vmatpush1.bf16.msra.mxu0 %v334
    %343 = vmatprep.subr.bf16.mxu0 0
    %344 = vmatpush1.bf16.msra.mxu0 0
    %345 = vmatprep.subr.bf16.mxu0 0
    %346 = vmatpush1.bf16.msra.mxu0 0
    %347 = vmatprep.subr.bf16.mxu0 0
    %348 = vmatpush1.bf16.msra.mxu0 0
    %349 = vmatprep.subr.bf16.mxu0 0
    %350 = vmatpush1.bf16.msra.mxu0 0
    %351 = vmatprep.subr.bf16.mxu0 0
    %352 = vmatpush1.bf16.msra.mxu0 0
    %353 = vmatprep.subr.bf16.mxu0 0
    %354 = vmatpush1.bf16.msra.mxu0 0
    %355 = vmatprep.subr.bf16.mxu0 0
    %356 = vmatpush1.bf16.msra.mxu0 0
    %357 = vmatprep.subr.bf16.mxu0 0
    %358 = vmatpush1.bf16.msra.mxu0 0
    %359 = vmatprep.subr.bf16.mxu0 0
    %360 = vmatpush1.bf16.msra.mxu0 0
    %361 = vmatprep.subr.bf16.mxu0 0
    %362 = vmatpush1.bf16.msra.mxu0 0
    %363 = vmatprep.subr.bf16.mxu0 0
    %364 = vmatpush1.bf16.msra.mxu0 0
    %365 = vmatprep.subr.bf16.mxu0 0
    %366 = vmatpush1.bf16.msra.mxu0 0
    %367 = vmatprep.subr.bf16.mxu0 0
    %368 = vmatpush1.bf16.msra.mxu0 0
    %369 = vmatprep.subr.bf16.mxu0 0
    %370 = vmatpush1.bf16.msra.mxu0 0
    %371 = vmatprep.mubr.bf16.mxu0 0
    %372 = vmatmul.mubr.bf16.gmra.mrb[0].mxu0 %v157
    %v373 = vpop.f32.mrb[0].mxu0
    %v374 = vadd.f32 %v308, %v373
    %v375 = vpop.f32.mrb[0].mxu0
    %v376 = vadd.f32 %v312, %v375
    %v377 = vpop.f32.mrb[0].mxu0
    %v378 = vadd.f32 %v308, %v377
    %v379 = vpop.f32.mrb[0].mxu0
    %v380 = vadd.f32 %v312, %v379
    %381 = vmatprep.mubr.bf16.mxu0 0
    %382 = vmatmul.mubr.bf16.gmra.mrb[0].mxu0 %v160
    %v383 = vpop.f32.mrb[0].mxu0
    %v384 = vadd.f32 %v308, %v383
    %v385 = vpop.f32.mrb[0].mxu0
    %v386 = vadd.f32 %v312, %v385
    %v387 = vpop.f32.mrb[0].mxu0
    %v388 = vadd.f32 %v308, %v387
    %v389 = vpop.f32.mrb[0].mxu0
    %v390 = vadd.f32 %v312, %v389
    %391 = vmatprep.mubr.bf16.mxu0 0
    %392 = vmatmul.mubr.bf16.gmra.mrb[0].mxu0 %v163
    %v393 = vpop.f32.mrb[0].mxu0
    %v394 = vadd.f32 %v308, %v393
    %v395 = vpop.f32.mrb[0].mxu0
    %v396 = vadd.f32 %v312, %v395
    %v397 = vpop.f32.mrb[0].mxu0
    %v398 = vadd.f32 %v308, %v397
    %v399 = vpop.f32.mrb[0].mxu0
    %v400 = vadd.f32 %v312, %v399
    %401 = vmatprep.mubr.bf16.mxu0 0
    %402 = vmatmul.mubr.bf16.gmra.mrb[0].mxu0 %v166
    %v403 = vpop.f32.mrb[0].mxu0
    %v404 = vadd.f32 %v308, %v403
    %v405 = vpop.f32.mrb[0].mxu0
    %v406 = vadd.f32 %v312, %v405
    %v407 = vpop.f32.mrb[0].mxu0
    %v408 = vadd.f32 %v308, %v407
    %v409 = vpop.f32.mrb[0].mxu0
    %v410 = vadd.f32 %v312, %v409
    %411 = vmatprep.mubr.bf16.mxu0 0
    %412 = vmatmul.mubr.bf16.gmra.mrb[0].mxu0 %v169
    %v413 = vpop.f32.mrb[0].mxu0
    %v414 = vadd.f32 %v308, %v413
    %v415 = vpop.f32.mrb[0].mxu0
    %v416 = vadd.f32 %v312, %v415
    %v417 = vpop.f32.mrb[0].mxu0
    %v418 = vadd.f32 %v308, %v417
    %v419 = vpop.f32.mrb[0].mxu0
    %v420 = vadd.f32 %v312, %v419
    %421 = vmatprep.mubr.bf16.mxu0 0
    %422 = vmatmul.mubr.bf16.gmra.mrb[0].mxu0 %v172
    %v423 = vpop.f32.mrb[0].mxu0
    %v424 = vadd.f32 %v308, %v423
    %v425 = vpop.f32.mrb[0].mxu0
    %v426 = vadd.f32 %v312, %v425
    %v427 = vpop.f32.mrb[0].mxu0
    %v428 = vadd.f32 %v308, %v427
    %v429 = vpop.f32.mrb[0].mxu0
    %v430 = vadd.f32 %v312, %v429
    %431 = vmatprep.mubr.bf16.mxu0 0
    %432 = vmatmul.mubr.bf16.gmra.mrb[0].mxu0 %v175
    %v433 = vpop.f32.mrb[0].mxu0
    %v434 = vadd.f32 %v308, %v433
    %v435 = vpop.f32.mrb[0].mxu0
    %v436 = vadd.f32 %v312, %v435
    %v437 = vpop.f32.mrb[0].mxu0
    %v438 = vadd.f32 %v308, %v437
    %v439 = vpop.f32.mrb[0].mxu0
    %v440 = vadd.f32 %v312, %v439
    %441 = vmatprep.mubr.bf16.mxu0 0
    %442 = vmatmul.mubr.bf16.gmra.mrb[0].mxu0 %v178
    %v443 = vpop.f32.mrb[0].mxu0
    %v444 = vadd.f32 %v308, %v443
    %v445 = vpop.f32.mrb[0].mxu0
    %v446 = vadd.f32 %v312, %v445
    %v447 = vpop.f32.mrb[0].mxu0
    %v448 = vadd.f32 %v308, %v447
    %v449 = vpop.f32.mrb[0].mxu0
    %v450 = vadd.f32 %v312, %v449
    %451 = vdwg.mxu0
    %v452 = vld [vmem:[#allocation5] sm:$0xff]
    %v453 = vld [vmem:[#allocation5 + $0x8] sm:$0xff]
    %v454 = vld [vmem:[#allocation5 + $0x10] sm:$0xff]
    %v455 = vld [vmem:[#allocation5 + $0x18] sm:$0x11]
    %v460 = vunpack.c.l.b16 %v452
    %v461 = vunpack.c.h.b16 %v452
    %v462 = vunpack.c.l.b16 %v453
    %v463 = vunpack.c.h.b16 %v453
    %v464 = vunpack.c.l.b16 %v454
    %v465 = vunpack.c.h.b16 %v454
    %v466 = vunpack.c.l.b16 %v455
    %v467 = vunpack.c.h.b16 %v455
    %v468 = vpack.c.b16 %v462, %v460
    %v469 = vpack.c.b16 %v463, %v461
    %v470 = vpack.c.b16 %v466, %v464
    %v471 = vpack.c.b16 %v467, %v465
    %v475 = vsel %vm180, %v470, 0
    %v478 = vsel %vm180, %v471, 0
    %480 = vmatprep.subr.bf16.mxu0 %v469
    %481 = vmatpush1.bf16.msra.mxu0 %v468
    %482 = vmatprep.subr.bf16.mxu0 %v478
    %483 = vmatpush1.bf16.msra.mxu0 %v475
    %484 = vmatprep.subr.bf16.mxu0 0
    %485 = vmatpush1.bf16.msra.mxu0 0
    %486 = vmatprep.subr.bf16.mxu0 0
    %487 = vmatpush1.bf16.msra.mxu0 0
    %488 = vmatprep.subr.bf16.mxu0 0
    %489 = vmatpush1.bf16.msra.mxu0 0
    %490 = vmatprep.subr.bf16.mxu0 0
    %491 = vmatpush1.bf16.msra.mxu0 0
    %492 = vmatprep.subr.bf16.mxu0 0
    %493 = vmatpush1.bf16.msra.mxu0 0
    %494 = vmatprep.subr.bf16.mxu0 0
    %495 = vmatpush1.bf16.msra.mxu0 0
    %496 = vmatprep.subr.bf16.mxu0 0
    %497 = vmatpush1.bf16.msra.mxu0 0
    %498 = vmatprep.subr.bf16.mxu0 0
    %499 = vmatpush1.bf16.msra.mxu0 0
    %500 = vmatprep.subr.bf16.mxu0 0
    %501 = vmatpush1.bf16.msra.mxu0 0
    %502 = vmatprep.subr.bf16.mxu0 0
    %503 = vmatpush1.bf16.msra.mxu0 0
    %504 = vmatprep.subr.bf16.mxu0 0
    %505 = vmatpush1.bf16.msra.mxu0 0
    %506 = vmatprep.subr.bf16.mxu0 0
    %507 = vmatpush1.bf16.msra.mxu0 0
    %508 = vmatprep.subr.bf16.mxu0 0
    %509 = vmatpush1.bf16.msra.mxu0 0
    %510 = vmatprep.subr.bf16.mxu0 0
    %511 = vmatpush1.bf16.msra.mxu0 0
    %512 = vmatprep.mubr.bf16.mxu0 0
    %513 = vmatmul.mubr.bf16.gmra.mrb[0].mxu0 %v157
    %v514 = vpop.f32.mrb[0].mxu0
    %v515 = vadd.f32 %v308, %v514
    %v516 = vpop.f32.mrb[0].mxu0
    %v517 = vadd.f32 %v312, %v516
    %v518 = vpop.f32.mrb[0].mxu0
    %v519 = vadd.f32 %v308, %v518
    %v520 = vpop.f32.mrb[0].mxu0
    %v521 = vadd.f32 %v312, %v520
    %522 = vmatprep.mubr.bf16.mxu0 0
    %523 = vmatmul.mubr.bf16.gmra.mrb[0].mxu0 %v160
    %v524 = vpop.f32.mrb[0].mxu0
    %v525 = vadd.f32 %v308, %v524
    %v526 = vpop.f32.mrb[0].mxu0
    %v527 = vadd.f32 %v312, %v526
    %v528 = vpop.f32.mrb[0].mxu0
    %v529 = vadd.f32 %v308, %v528
    %v530 = vpop.f32.mrb[0].mxu0
    %v531 = vadd.f32 %v312, %v530
    %532 = vmatprep.mubr.bf16.mxu0 0
    %533 = vmatmul.mubr.bf16.gmra.mrb[0].mxu0 %v163
    %v534 = vpop.f32.mrb[0].mxu0
    %v535 = vadd.f32 %v308, %v534
    %v536 = vpop.f32.mrb[0].mxu0
    %v537 = vadd.f32 %v312, %v536
    %v538 = vpop.f32.mrb[0].mxu0
    %v539 = vadd.f32 %v308, %v538
    %v540 = vpop.f32.mrb[0].mxu0
    %v541 = vadd.f32 %v312, %v540
    %542 = vmatprep.mubr.bf16.mxu0 0
    %543 = vmatmul.mubr.bf16.gmra.mrb[0].mxu0 %v166
    %v544 = vpop.f32.mrb[0].mxu0
    %v545 = vadd.f32 %v308, %v544
    %v546 = vpop.f32.mrb[0].mxu0
    %v547 = vadd.f32 %v312, %v546
    %v548 = vpop.f32.mrb[0].mxu0
    %v549 = vadd.f32 %v308, %v548
    %v550 = vpop.f32.mrb[0].mxu0
    %v551 = vadd.f32 %v312, %v550
    %552 = vmatprep.mubr.bf16.mxu0 0
    %553 = vmatmul.mubr.bf16.gmra.mrb[0].mxu0 %v169
    %v554 = vpop.f32.mrb[0].mxu0
    %v555 = vadd.f32 %v308, %v554
    %v556 = vpop.f32.mrb[0].mxu0
    %v557 = vadd.f32 %v312, %v556
    %v558 = vpop.f32.mrb[0].mxu0
    %v559 = vadd.f32 %v308, %v558
    %v560 = vpop.f32.mrb[0].mxu0
    %v561 = vadd.f32 %v312, %v560
    %562 = vmatprep.mubr.bf16.mxu0 0
    %563 = vmatmul.mubr.bf16.gmra.mrb[0].mxu0 %v172
    %v564 = vpop.f32.mrb[0].mxu0
    %v565 = vadd.f32 %v308, %v564
    %v566 = vpop.f32.mrb[0].mxu0
    %v567 = vadd.f32 %v312, %v566
    %v568 = vpop.f32.mrb[0].mxu0
    %v569 = vadd.f32 %v308, %v568
    %v570 = vpop.f32.mrb[0].mxu0
    %v571 = vadd.f32 %v312, %v570
    %572 = vmatprep.mubr.bf16.mxu0 0
    %573 = vmatmul.mubr.bf16.gmra.mrb[0].mxu0 %v175
    %v574 = vpop.f32.mrb[0].mxu0
    %v575 = vadd.f32 %v308, %v574
    %v576 = vpop.f32.mrb[0].mxu0
    %v577 = vadd.f32 %v312, %v576
    %v578 = vpop.f32.mrb[0].mxu0
    %v579 = vadd.f32 %v308, %v578
    %v580 = vpop.f32.mrb[0].mxu0
    %v581 = vadd.f32 %v312, %v580
    %582 = vmatprep.mubr.bf16.mxu0 0
    %583 = vmatmul.mubr.bf16.gmra.mrb[0].mxu0 %v178
    %v584 = vpop.f32.mrb[0].mxu0
    %v585 = vadd.f32 %v308, %v584
    %v586 = vpop.f32.mrb[0].mxu0
    %v587 = vadd.f32 %v312, %v586
    %v588 = vpop.f32.mrb[0].mxu0
    %v589 = vadd.f32 %v308, %v588
    %v590 = vpop.f32.mrb[0].mxu0
    %v591 = vadd.f32 %v312, %v590
    %592 = vdwg.mxu0
    %v593 = vmax.f32 %v222, %v374
    %v594 = vmax.f32 %v224, %v376
    %v595 = vmax.f32 %v226, %v378
    %v596 = vmax.f32 %v228, %v380
    %v597 = vmax.f32 %v232, %v384
    %v598 = vmax.f32 %v234, %v386
    %v599 = vmax.f32 %v236, %v388
    %v600 = vmax.f32 %v238, %v390
    %v601 = vmax.f32 %v242, %v394
    %v602 = vmax.f32 %v244, %v396
    %v603 = vmax.f32 %v246, %v398
    %v604 = vmax.f32 %v248, %v400
    %v605 = vmax.f32 %v252, %v404
    %v606 = vmax.f32 %v254, %v406
    %v607 = vmax.f32 %v256, %v408
    %v608 = vmax.f32 %v258, %v410
    %v609 = vmax.f32 %v262, %v414
    %v610 = vmax.f32 %v264, %v416
    %v611 = vmax.f32 %v266, %v418
    %v612 = vmax.f32 %v268, %v420
    %v613 = vmax.f32 %v272, %v424
    %v614 = vmax.f32 %v274, %v426
    %v615 = vmax.f32 %v276, %v428
    %v616 = vmax.f32 %v278, %v430
    %v617 = vmax.f32 %v282, %v434
    %v618 = vmax.f32 %v284, %v436
    %v619 = vmax.f32 %v286, %v438
    %v620 = vmax.f32 %v288, %v440
    %v621 = vmax.f32 %v292, %v444
    %v622 = vmax.f32 %v294, %v446
    %v623 = vmax.f32 %v296, %v448
    %v624 = vmax.f32 %v298, %v450
    %v625 = vmax.f32 %v593, %v515
    %v626 = vmax.f32 %v594, %v517
    %v627 = vmax.f32 %v595, %v519
    %v628 = vmax.f32 %v596, %v521
    %v629 = vmax.f32 %v597, %v525
    %v630 = vmax.f32 %v598, %v527
    %v631 = vmax.f32 %v599, %v529
    %v632 = vmax.f32 %v600, %v531
    %v633 = vmax.f32 %v601, %v535
    %v634 = vmax.f32 %v602, %v537
    %v635 = vmax.f32 %v603, %v539
    %v636 = vmax.f32 %v604, %v541
    %v637 = vmax.f32 %v605, %v545
    %v638 = vmax.f32 %v606, %v547
    %v639 = vmax.f32 %v607, %v549
    %v640 = vmax.f32 %v608, %v551
    %v641 = vmax.f32 %v609, %v555
    %v642 = vmax.f32 %v610, %v557
    %v643 = vmax.f32 %v611, %v559
    %v644 = vmax.f32 %v612, %v561
    %v645 = vmax.f32 %v613, %v565
    %v646 = vmax.f32 %v614, %v567
    %v647 = vmax.f32 %v615, %v569
    %v648 = vmax.f32 %v616, %v571
    %v649 = vmax.f32 %v617, %v575
    %v650 = vmax.f32 %v618, %v577
    %v651 = vmax.f32 %v619, %v579
    %v652 = vmax.f32 %v620, %v581
    %v653 = vmax.f32 %v621, %v585
    %v654 = vmax.f32 %v622, %v587
    %v655 = vmax.f32 %v623, %v589
    %v656 = vmax.f32 %v624, %v591
    %v657 = vmax.f32 %v625, 0.0
    %v658 = vmax.f32 %v626, 0.0
    %v659 = vmax.f32 %v627, 0.0
    %v660 = vmax.f32 %v628, 0.0
    %v661 = vmax.f32 %v629, 0.0
    %v662 = vmax.f32 %v630, 0.0
    %v663 = vmax.f32 %v631, 0.0
    %v664 = vmax.f32 %v632, 0.0
    %v665 = vmax.f32 %v633, 0.0
    %v666 = vmax.f32 %v634, 0.0
    %v667 = vmax.f32 %v635, 0.0
    %v668 = vmax.f32 %v636, 0.0
    %v669 = vmax.f32 %v637, 0.0
    %v670 = vmax.f32 %v638, 0.0
    %v671 = vmax.f32 %v639, 0.0
    %v672 = vmax.f32 %v640, 0.0
    %v673 = vmax.f32 %v641, 0.0
    %v674 = vmax.f32 %v642, 0.0
    %v675 = vmax.f32 %v643, 0.0
    %v676 = vmax.f32 %v644, 0.0
    %v677 = vmax.f32 %v645, 0.0
    %v678 = vmax.f32 %v646, 0.0
    %v679 = vmax.f32 %v647, 0.0
    %v680 = vmax.f32 %v648, 0.0
    %v681 = vmax.f32 %v649, 0.0
    %v682 = vmax.f32 %v650, 0.0
    %v683 = vmax.f32 %v651, 0.0
    %v684 = vmax.f32 %v652, 0.0
    %v685 = vmax.f32 %v653, 0.0
    %v686 = vmax.f32 %v654, 0.0
    %v687 = vmax.f32 %v655, 0.0
    %v688 = vmax.f32 %v656, 0.0
    %v689 = vpack.c.bf16 %v659, %v657
    %v690 = vpack.c.bf16 %v660, %v658
    %v691 = vpack.c.bf16 %v663, %v661
    %v692 = vpack.c.bf16 %v664, %v662
    %v693 = vpack.c.bf16 %v667, %v665
    %v694 = vpack.c.bf16 %v668, %v666
    %v695 = vpack.c.bf16 %v671, %v669
    %v696 = vpack.c.bf16 %v672, %v670
    %v697 = vpack.c.bf16 %v675, %v673
    %v698 = vpack.c.bf16 %v676, %v674
    %v699 = vpack.c.bf16 %v679, %v677
    %v700 = vpack.c.bf16 %v680, %v678
    %v701 = vpack.c.bf16 %v683, %v681
    %v702 = vpack.c.bf16 %v684, %v682
    %v703 = vpack.c.bf16 %v687, %v685
    %v704 = vpack.c.bf16 %v688, %v686
    %v705 = vld [vmem:[#allocation7] sm:$0xff]
    %v706 = vld [vmem:[#allocation7 + $0x8] sm:$0xff]
    %v707 = vld [vmem:[#allocation7 + $0x10] sm:$0xff]
    %v708 = vld [vmem:[#allocation7 + $0x18] sm:$0xff]
    %v709 = vld [vmem:[#allocation7 + $0x20] sm:$0xff]
    %v710 = vld [vmem:[#allocation7 + $0x28] sm:$0xff]
    %v711 = vld [vmem:[#allocation7 + $0x30] sm:$0xff]
    %v712 = vld [vmem:[#allocation7 + $0x38] sm:$0xff]
    %v713 = vld [vmem:[#allocation7 + $0x40] sm:$0xff]
    %v714 = vld [vmem:[#allocation7 + $0x48] sm:$0xff]
    %v715 = vld [vmem:[#allocation7 + $0x50] sm:$0xff]
    %v716 = vld [vmem:[#allocation7 + $0x58] sm:$0xff]
    %v717 = vld [vmem:[#allocation7 + $0x60] sm:$0xff]
    %v718 = vld [vmem:[#allocation7 + $0x68] sm:$0xff]
    %v719 = vld [vmem:[#allocation7 + $0x70] sm:$0xff]
    %v720 = vld [vmem:[#allocation7 + $0x78] sm:$0xff]
    %v721 = vld [vmem:[#allocation7 + $0x80] sm:$0xff]
    %v722 = vld [vmem:[#allocation7 + $0x88] sm:$0xff]
    %v723 = vld [vmem:[#allocation7 + $0x90] sm:$0xff]
    %v724 = vld [vmem:[#allocation7 + $0x98] sm:$0xff]
    %v725 = vld [vmem:[#allocation7 + $0xa0] sm:$0xff]
    %v726 = vld [vmem:[#allocation7 + $0xa8] sm:$0xff]
    %v727 = vld [vmem:[#allocation7 + $0xb0] sm:$0xff]
    %v728 = vld [vmem:[#allocation7 + $0xb8] sm:$0xff]
    %v729 = vld [vmem:[#allocation7 + $0xc0] sm:$0xff]
    %v730 = vld [vmem:[#allocation7 + $0xc8] sm:$0xff]
    %v731 = vld [vmem:[#allocation7 + $0xd0] sm:$0xff]
    %v732 = vld [vmem:[#allocation7 + $0xd8] sm:$0xff]
    %v733 = vld [vmem:[#allocation7 + $0xe0] sm:$0xff]
    %v734 = vld [vmem:[#allocation7 + $0xe8] sm:$0xff]
    %v735 = vld [vmem:[#allocation7 + $0xf0] sm:$0xff]
    %v736 = vld [vmem:[#allocation7 + $0xf8] sm:$0xff]
    %v738 = vlaneseq
    %v739 = vshrl.u32 %v738, 7
    %v740 = vsub.s32 0, %v739
    %v741 = vrot.slane %v93, %v740
    %v742 = vlaneseq
    %v743 = vshrl.u32 %v742, 7
    %v744 = vsub.s32 1, %v743
    %v745 = vrot.slane %v93, %v744
    %v780 = vunpack.c.l.b16 %v705
    %v781 = vunpack.c.h.b16 %v705
    %v782 = vunpack.c.l.b16 %v706
    %v783 = vunpack.c.h.b16 %v706
    %v784 = vunpack.c.l.b16 %v707
    %v785 = vunpack.c.h.b16 %v707
    %v786 = vunpack.c.l.b16 %v708
    %v787 = vunpack.c.h.b16 %v708
    %v788 = vunpack.c.l.b16 %v709
    %v789 = vunpack.c.h.b16 %v709
    %v790 = vunpack.c.l.b16 %v710
    %v791 = vunpack.c.h.b16 %v710
    %v792 = vunpack.c.l.b16 %v711
    %v793 = vunpack.c.h.b16 %v711
    %v794 = vunpack.c.l.b16 %v712
    %v795 = vunpack.c.h.b16 %v712
    %v796 = vunpack.c.l.b16 %v713
    %v797 = vunpack.c.h.b16 %v713
    %v798 = vunpack.c.l.b16 %v714
    %v799 = vunpack.c.h.b16 %v714
    %v800 = vunpack.c.l.b16 %v715
    %v801 = vunpack.c.h.b16 %v715
    %v802 = vunpack.c.l.b16 %v716
    %v803 = vunpack.c.h.b16 %v716
    %v804 = vunpack.c.l.b16 %v717
    %v805 = vunpack.c.h.b16 %v717
    %v806 = vunpack.c.l.b16 %v718
    %v807 = vunpack.c.h.b16 %v718
    %v808 = vunpack.c.l.b16 %v719
    %v809 = vunpack.c.h.b16 %v719
    %v810 = vunpack.c.l.b16 %v720
    %v811 = vunpack.c.h.b16 %v720
    %v812 = vunpack.c.l.b16 %v721
    %v813 = vunpack.c.h.b16 %v721
    %v814 = vunpack.c.l.b16 %v722
    %v815 = vunpack.c.h.b16 %v722
    %v816 = vunpack.c.l.b16 %v723
    %v817 = vunpack.c.h.b16 %v723
    %v818 = vunpack.c.l.b16 %v724
    %v819 = vunpack.c.h.b16 %v724
    %v820 = vunpack.c.l.b16 %v725
    %v821 = vunpack.c.h.b16 %v725
    %v822 = vunpack.c.l.b16 %v726
    %v823 = vunpack.c.h.b16 %v726
    %v824 = vunpack.c.l.b16 %v727
    %v825 = vunpack.c.h.b16 %v727
    %v826 = vunpack.c.l.b16 %v728
    %v827 = vunpack.c.h.b16 %v728
    %v828 = vunpack.c.l.b16 %v729
    %v829 = vunpack.c.h.b16 %v729
    %v830 = vunpack.c.l.b16 %v730
    %v831 = vunpack.c.h.b16 %v730
    %v832 = vunpack.c.l.b16 %v731
    %v833 = vunpack.c.h.b16 %v731
    %v834 = vunpack.c.l.b16 %v732
    %v835 = vunpack.c.h.b16 %v732
    %v836 = vunpack.c.l.b16 %v733
    %v837 = vunpack.c.h.b16 %v733
    %v838 = vunpack.c.l.b16 %v734
    %v839 = vunpack.c.h.b16 %v734
    %v840 = vunpack.c.l.b16 %v735
    %v841 = vunpack.c.h.b16 %v735
    %v842 = vunpack.c.l.b16 %v736
    %v843 = vunpack.c.h.b16 %v736
    %v844 = vpack.c.b16 %v782, %v780
    %v845 = vpack.c.b16 %v783, %v781
    %v846 = vpack.c.b16 %v786, %v784
    %v847 = vpack.c.b16 %v787, %v785
    %v848 = vpack.c.b16 %v790, %v788
    %v849 = vpack.c.b16 %v791, %v789
    %v850 = vpack.c.b16 %v794, %v792
    %v851 = vpack.c.b16 %v795, %v793
    %v852 = vpack.c.b16 %v798, %v796
    %v853 = vpack.c.b16 %v799, %v797
    %v854 = vpack.c.b16 %v802, %v800
    %v855 = vpack.c.b16 %v803, %v801
    %v856 = vpack.c.b16 %v806, %v804
    %v857 = vpack.c.b16 %v807, %v805
    %v858 = vpack.c.b16 %v810, %v808
    %v859 = vpack.c.b16 %v811, %v809
    %v860 = vpack.c.b16 %v814, %v812
    %v861 = vpack.c.b16 %v815, %v813
    %v862 = vpack.c.b16 %v818, %v816
    %v863 = vpack.c.b16 %v819, %v817
    %v864 = vpack.c.b16 %v822, %v820
    %v865 = vpack.c.b16 %v823, %v821
    %v866 = vpack.c.b16 %v826, %v824
    %v867 = vpack.c.b16 %v827, %v825
    %v868 = vpack.c.b16 %v830, %v828
    %v869 = vpack.c.b16 %v831, %v829
    %v870 = vpack.c.b16 %v834, %v832
    %v871 = vpack.c.b16 %v835, %v833
    %v872 = vpack.c.b16 %v838, %v836
    %v873 = vpack.c.b16 %v839, %v837
    %v874 = vpack.c.b16 %v842, %v840
    %v875 = vpack.c.b16 %v843, %v841
    %908 = vmatprep.subr.bf16.mxu0 %v845
    %909 = vmatpush1.bf16.msra.mxu0 %v844
    %910 = vmatprep.subr.bf16.mxu0 %v847
    %911 = vmatpush1.bf16.msra.mxu0 %v846
    %912 = vmatprep.subr.bf16.mxu0 %v849
    %913 = vmatpush1.bf16.msra.mxu0 %v848
    %914 = vmatprep.subr.bf16.mxu0 %v851
    %915 = vmatpush1.bf16.msra.mxu0 %v850
    %916 = vmatprep.subr.bf16.mxu0 %v853
    %917 = vmatpush1.bf16.msra.mxu0 %v852
    %918 = vmatprep.subr.bf16.mxu0 %v855
    %919 = vmatpush1.bf16.msra.mxu0 %v854
    %920 = vmatprep.subr.bf16.mxu0 %v857
    %921 = vmatpush1.bf16.msra.mxu0 %v856
    %922 = vmatprep.subr.bf16.mxu0 %v859
    %923 = vmatpush1.bf16.msra.mxu0 %v858
    %924 = vmatprep.subr.bf16.mxu0 %v861
    %925 = vmatpush1.bf16.msra.mxu0 %v860
    %926 = vmatprep.subr.bf16.mxu0 %v863
    %927 = vmatpush1.bf16.msra.mxu0 %v862
    %928 = vmatprep.subr.bf16.mxu0 %v865
    %929 = vmatpush1.bf16.msra.mxu0 %v864
    %930 = vmatprep.subr.bf16.mxu0 %v867
    %931 = vmatpush1.bf16.msra.mxu0 %v866
    %932 = vmatprep.subr.bf16.mxu0 %v869
    %933 = vmatpush1.bf16.msra.mxu0 %v868
    %934 = vmatprep.subr.bf16.mxu0 %v871
    %935 = vmatpush1.bf16.msra.mxu0 %v870
    %936 = vmatprep.subr.bf16.mxu0 %v873
    %937 = vmatpush1.bf16.msra.mxu0 %v872
    %938 = vmatprep.subr.bf16.mxu0 %v875
    %939 = vmatpush1.bf16.msra.mxu0 %v874
    %940 = vmatprep.mubr.bf16.mxu0 %v690
    %941 = vmatmul.mubr.bf16.gmra.mrb[0].mxu0 %v689
    %v942 = vpop.f32.mrb[0].mxu0
    %v943 = vadd.f32 %v741, %v942
    %v944 = vpop.f32.mrb[0].mxu0
    %v945 = vadd.f32 %v745, %v944
    %v946 = vpop.f32.mrb[0].mxu0
    %v947 = vadd.f32 %v741, %v946
    %v948 = vpop.f32.mrb[0].mxu0
    %v949 = vadd.f32 %v745, %v948
    %950 = vmatprep.mubr.bf16.mxu0 %v692
    %951 = vmatmul.mubr.bf16.gmra.mrb[0].mxu0 %v691
    %v952 = vpop.f32.mrb[0].mxu0
    %v953 = vadd.f32 %v741, %v952
    %v954 = vpop.f32.mrb[0].mxu0
    %v955 = vadd.f32 %v745, %v954
    %v956 = vpop.f32.mrb[0].mxu0
    %v957 = vadd.f32 %v741, %v956
    %v958 = vpop.f32.mrb[0].mxu0
    %v959 = vadd.f32 %v745, %v958
    %960 = vmatprep.mubr.bf16.mxu0 %v694
    %961 = vmatmul.mubr.bf16.gmra.mrb[0].mxu0 %v693
    %v962 = vpop.f32.mrb[0].mxu0
    %v963 = vadd.f32 %v741, %v962
    %v964 = vpop.f32.mrb[0].mxu0
    %v965 = vadd.f32 %v745, %v964
    %v966 = vpop.f32.mrb[0].mxu0
    %v967 = vadd.f32 %v741, %v966
    %v968 = vpop.f32.mrb[0].mxu0
    %v969 = vadd.f32 %v745, %v968
    %970 = vmatprep.mubr.bf16.mxu0 %v696
    %971 = vmatmul.mubr.bf16.gmra.mrb[0].mxu0 %v695
    %v972 = vpop.f32.mrb[0].mxu0
    %v973 = vadd.f32 %v741, %v972
    %v974 = vpop.f32.mrb[0].mxu0
    %v975 = vadd.f32 %v745, %v974
    %v976 = vpop.f32.mrb[0].mxu0
    %v977 = vadd.f32 %v741, %v976
    %v978 = vpop.f32.mrb[0].mxu0
    %v979 = vadd.f32 %v745, %v978
    %980 = vmatprep.mubr.bf16.mxu0 %v698
    %981 = vmatmul.mubr.bf16.gmra.mrb[0].mxu0 %v697
    %v982 = vpop.f32.mrb[0].mxu0
    %v983 = vadd.f32 %v741, %v982
    %v984 = vpop.f32.mrb[0].mxu0
    %v985 = vadd.f32 %v745, %v984
    %v986 = vpop.f32.mrb[0].mxu0
    %v987 = vadd.f32 %v741, %v986
    %v988 = vpop.f32.mrb[0].mxu0
    %v989 = vadd.f32 %v745, %v988
    %990 = vmatprep.mubr.bf16.mxu0 %v700
    %991 = vmatmul.mubr.bf16.gmra.mrb[0].mxu0 %v699
    %v992 = vpop.f32.mrb[0].mxu0
    %v993 = vadd.f32 %v741, %v992
    %v994 = vpop.f32.mrb[0].mxu0
    %v995 = vadd.f32 %v745, %v994
    %v996 = vpop.f32.mrb[0].mxu0
    %v997 = vadd.f32 %v741, %v996
    %v998 = vpop.f32.mrb[0].mxu0
    %v999 = vadd.f32 %v745, %v998
    %1000 = vmatprep.mubr.bf16.mxu0 %v702
    %1001 = vmatmul.mubr.bf16.gmra.mrb[0].mxu0 %v701
    %v1002 = vpop.f32.mrb[0].mxu0
    %v1003 = vadd.f32 %v741, %v1002
    %v1004 = vpop.f32.mrb[0].mxu0
    %v1005 = vadd.f32 %v745, %v1004
    %v1006 = vpop.f32.mrb[0].mxu0
    %v1007 = vadd.f32 %v741, %v1006
    %v1008 = vpop.f32.mrb[0].mxu0
    %v1009 = vadd.f32 %v745, %v1008
    %1010 = vmatprep.mubr.bf16.mxu0 %v704
    %1011 = vmatmul.mubr.bf16.gmra.mrb[0].mxu0 %v703
    %v1012 = vpop.f32.mrb[0].mxu0
    %v1013 = vadd.f32 %v741, %v1012
    %v1014 = vpop.f32.mrb[0].mxu0
    %v1015 = vadd.f32 %v745, %v1014
    %v1016 = vpop.f32.mrb[0].mxu0
    %v1017 = vadd.f32 %v741, %v1016
    %v1018 = vpop.f32.mrb[0].mxu0
    %v1019 = vadd.f32 %v745, %v1018
    %1020 = vdwg.mxu0
    %v1021 = vmax.f32 %v943, 0.0
    %v1022 = vmax.f32 %v945, 0.0
    %v1023 = vmax.f32 %v947, 0.0
    %v1024 = vmax.f32 %v949, 0.0
    %v1025 = vmax.f32 %v953, 0.0
    %v1026 = vmax.f32 %v955, 0.0
    %v1027 = vmax.f32 %v957, 0.0
    %v1028 = vmax.f32 %v959, 0.0
    %v1029 = vmax.f32 %v963, 0.0
    %v1030 = vmax.f32 %v965, 0.0
    %v1031 = vmax.f32 %v967, 0.0
    %v1032 = vmax.f32 %v969, 0.0
    %v1033 = vmax.f32 %v973, 0.0
    %v1034 = vmax.f32 %v975, 0.0
    %v1035 = vmax.f32 %v977, 0.0
    %v1036 = vmax.f32 %v979, 0.0
    %v1037 = vmax.f32 %v983, 0.0
    %v1038 = vmax.f32 %v985, 0.0
    %v1039 = vmax.f32 %v987, 0.0
    %v1040 = vmax.f32 %v989, 0.0
    %v1041 = vmax.f32 %v993, 0.0
    %v1042 = vmax.f32 %v995, 0.0
    %v1043 = vmax.f32 %v997, 0.0
    %v1044 = vmax.f32 %v999, 0.0
    %v1045 = vmax.f32 %v1003, 0.0
    %v1046 = vmax.f32 %v1005, 0.0
    %v1047 = vmax.f32 %v1007, 0.0
    %v1048 = vmax.f32 %v1009, 0.0
    %v1049 = vmax.f32 %v1013, 0.0
    %v1050 = vmax.f32 %v1015, 0.0
    %v1051 = vmax.f32 %v1017, 0.0
    %v1052 = vmax.f32 %v1019, 0.0
    %v1053 = vpack.c.bf16 %v1023, %v1021
    %v1054 = vpack.c.bf16 %v1024, %v1022
    %v1055 = vpack.c.bf16 %v1027, %v1025
    %v1056 = vpack.c.bf16 %v1028, %v1026
    %v1057 = vpack.c.bf16 %v1031, %v1029
    %v1058 = vpack.c.bf16 %v1032, %v1030
    %v1059 = vpack.c.bf16 %v1035, %v1033
    %v1060 = vpack.c.bf16 %v1036, %v1034
    %v1061 = vpack.c.bf16 %v1039, %v1037
    %v1062 = vpack.c.bf16 %v1040, %v1038
    %v1063 = vpack.c.bf16 %v1043, %v1041
    %v1064 = vpack.c.bf16 %v1044, %v1042
    %v1065 = vpack.c.bf16 %v1047, %v1045
    %v1066 = vpack.c.bf16 %v1048, %v1046
    %v1067 = vpack.c.bf16 %v1051, %v1049
    %v1068 = vpack.c.bf16 %v1052, %v1050
    %v1069 = vld [vmem:[#allocation8] sm:$0xff]
    %v1070 = vld [vmem:[#allocation8 + $0x8] sm:$0xff]
    %v1071 = vld [vmem:[#allocation8 + $0x10] sm:$0xff]
    %v1072 = vld [vmem:[#allocation8 + $0x18] sm:$0xff]
    %v1073 = vld [vmem:[#allocation8 + $0x20] sm:$0xff]
    %v1074 = vld [vmem:[#allocation8 + $0x28] sm:$0xff]
    %v1075 = vld [vmem:[#allocation8 + $0x30] sm:$0xff]
    %v1076 = vld [vmem:[#allocation8 + $0x38] sm:$0xff]
    %v1077 = vld [vmem:[#allocation8 + $0x40] sm:$0xff]
    %v1078 = vld [vmem:[#allocation8 + $0x48] sm:$0xff]
    %v1079 = vld [vmem:[#allocation8 + $0x50] sm:$0xff]
    %v1080 = vld [vmem:[#allocation8 + $0x58] sm:$0xff]
    %v1081 = vld [vmem:[#allocation8 + $0x60] sm:$0xff]
    %v1082 = vld [vmem:[#allocation8 + $0x68] sm:$0xff]
    %v1083 = vld [vmem:[#allocation8 + $0x70] sm:$0xff]
    %v1084 = vld [vmem:[#allocation8 + $0x78] sm:$0xff]
    %v1085 = vld [vmem:[#allocation8 + $0x80] sm:$0xff]
    %v1086 = vld [vmem:[#allocation8 + $0x88] sm:$0xff]
    %v1087 = vld [vmem:[#allocation8 + $0x90] sm:$0xff]
    %v1088 = vld [vmem:[#allocation8 + $0x98] sm:$0xff]
    %v1089 = vld [vmem:[#allocation8 + $0xa0] sm:$0xff]
    %v1090 = vld [vmem:[#allocation8 + $0xa8] sm:$0xff]
    %v1091 = vld [vmem:[#allocation8 + $0xb0] sm:$0xff]
    %v1092 = vld [vmem:[#allocation8 + $0xb8] sm:$0xff]
    %v1093 = vld [vmem:[#allocation8 + $0xc0] sm:$0xff]
    %v1094 = vld [vmem:[#allocation8 + $0xc8] sm:$0xff]
    %v1095 = vld [vmem:[#allocation8 + $0xd0] sm:$0xff]
    %v1096 = vld [vmem:[#allocation8 + $0xd8] sm:$0xff]
    %v1097 = vld [vmem:[#allocation8 + $0xe0] sm:$0xff]
    %v1098 = vld [vmem:[#allocation8 + $0xe8] sm:$0xff]
    %v1099 = vld [vmem:[#allocation8 + $0xf0] sm:$0xff]
    %v1100 = vld [vmem:[#allocation8 + $0xf8] sm:$0xff]
    %v1102 = vlaneseq
    %v1103 = vshrl.u32 %v1102, 7
    %v1104 = vsub.s32 0, %v1103
    %v1105 = vrot.slane %v95, %v1104
    %v1106 = vlaneseq
    %v1107 = vshrl.u32 %v1106, 7
    %v1108 = vsub.s32 1, %v1107
    %v1109 = vrot.slane %v95, %v1108
    %v1144 = vunpack.c.l.b16 %v1069
    %v1145 = vunpack.c.h.b16 %v1069
    %v1146 = vunpack.c.l.b16 %v1070
    %v1147 = vunpack.c.h.b16 %v1070
    %v1148 = vunpack.c.l.b16 %v1071
    %v1149 = vunpack.c.h.b16 %v1071
    %v1150 = vunpack.c.l.b16 %v1072
    %v1151 = vunpack.c.h.b16 %v1072
    %v1152 = vunpack.c.l.b16 %v1073
    %v1153 = vunpack.c.h.b16 %v1073
    %v1154 = vunpack.c.l.b16 %v1074
    %v1155 = vunpack.c.h.b16 %v1074
    %v1156 = vunpack.c.l.b16 %v1075
    %v1157 = vunpack.c.h.b16 %v1075
    %v1158 = vunpack.c.l.b16 %v1076
    %v1159 = vunpack.c.h.b16 %v1076
    %v1160 = vunpack.c.l.b16 %v1077
    %v1161 = vunpack.c.h.b16 %v1077
    %v1162 = vunpack.c.l.b16 %v1078
    %v1163 = vunpack.c.h.b16 %v1078
    %v1164 = vunpack.c.l.b16 %v1079
    %v1165 = vunpack.c.h.b16 %v1079
    %v1166 = vunpack.c.l.b16 %v1080
    %v1167 = vunpack.c.h.b16 %v1080
    %v1168 = vunpack.c.l.b16 %v1081
    %v1169 = vunpack.c.h.b16 %v1081
    %v1170 = vunpack.c.l.b16 %v1082
    %v1171 = vunpack.c.h.b16 %v1082
    %v1172 = vunpack.c.l.b16 %v1083
    %v1173 = vunpack.c.h.b16 %v1083
    %v1174 = vunpack.c.l.b16 %v1084
    %v1175 = vunpack.c.h.b16 %v1084
    %v1176 = vunpack.c.l.b16 %v1085
    %v1177 = vunpack.c.h.b16 %v1085
    %v1178 = vunpack.c.l.b16 %v1086
    %v1179 = vunpack.c.h.b16 %v1086
    %v1180 = vunpack.c.l.b16 %v1087
    %v1181 = vunpack.c.h.b16 %v1087
    %v1182 = vunpack.c.l.b16 %v1088
    %v1183 = vunpack.c.h.b16 %v1088
    %v1184 = vunpack.c.l.b16 %v1089
    %v1185 = vunpack.c.h.b16 %v1089
    %v1186 = vunpack.c.l.b16 %v1090
    %v1187 = vunpack.c.h.b16 %v1090
    %v1188 = vunpack.c.l.b16 %v1091
    %v1189 = vunpack.c.h.b16 %v1091
    %v1190 = vunpack.c.l.b16 %v1092
    %v1191 = vunpack.c.h.b16 %v1092
    %v1192 = vunpack.c.l.b16 %v1093
    %v1193 = vunpack.c.h.b16 %v1093
    %v1194 = vunpack.c.l.b16 %v1094
    %v1195 = vunpack.c.h.b16 %v1094
    %v1196 = vunpack.c.l.b16 %v1095
    %v1197 = vunpack.c.h.b16 %v1095
    %v1198 = vunpack.c.l.b16 %v1096
    %v1199 = vunpack.c.h.b16 %v1096
    %v1200 = vunpack.c.l.b16 %v1097
    %v1201 = vunpack.c.h.b16 %v1097
    %v1202 = vunpack.c.l.b16 %v1098
    %v1203 = vunpack.c.h.b16 %v1098
    %v1204 = vunpack.c.l.b16 %v1099
    %v1205 = vunpack.c.h.b16 %v1099
    %v1206 = vunpack.c.l.b16 %v1100
    %v1207 = vunpack.c.h.b16 %v1100
    %v1208 = vpack.c.b16 %v1146, %v1144
    %v1209 = vpack.c.b16 %v1147, %v1145
    %v1210 = vpack.c.b16 %v1150, %v1148
    %v1211 = vpack.c.b16 %v1151, %v1149
    %v1212 = vpack.c.b16 %v1154, %v1152
    %v1213 = vpack.c.b16 %v1155, %v1153
    %v1214 = vpack.c.b16 %v1158, %v1156
    %v1215 = vpack.c.b16 %v1159, %v1157
    %v1216 = vpack.c.b16 %v1162, %v1160
    %v1217 = vpack.c.b16 %v1163, %v1161
    %v1218 = vpack.c.b16 %v1166, %v1164
    %v1219 = vpack.c.b16 %v1167, %v1165
    %v1220 = vpack.c.b16 %v1170, %v1168
    %v1221 = vpack.c.b16 %v1171, %v1169
    %v1222 = vpack.c.b16 %v1174, %v1172
    %v1223 = vpack.c.b16 %v1175, %v1173
    %v1224 = vpack.c.b16 %v1178, %v1176
    %v1225 = vpack.c.b16 %v1179, %v1177
    %v1226 = vpack.c.b16 %v1182, %v1180
    %v1227 = vpack.c.b16 %v1183, %v1181
    %v1228 = vpack.c.b16 %v1186, %v1184
    %v1229 = vpack.c.b16 %v1187, %v1185
    %v1230 = vpack.c.b16 %v1190, %v1188
    %v1231 = vpack.c.b16 %v1191, %v1189
    %v1232 = vpack.c.b16 %v1194, %v1192
    %v1233 = vpack.c.b16 %v1195, %v1193
    %v1234 = vpack.c.b16 %v1198, %v1196
    %v1235 = vpack.c.b16 %v1199, %v1197
    %v1236 = vpack.c.b16 %v1202, %v1200
    %v1237 = vpack.c.b16 %v1203, %v1201
    %v1238 = vpack.c.b16 %v1206, %v1204
    %v1239 = vpack.c.b16 %v1207, %v1205
    %1272 = vmatprep.subr.bf16.mxu0 %v1209
    %1273 = vmatpush1.bf16.msra.mxu0 %v1208
    %1274 = vmatprep.subr.bf16.mxu0 %v1211
    %1275 = vmatpush1.bf16.msra.mxu0 %v1210
    %1276 = vmatprep.subr.bf16.mxu0 %v1213
    %1277 = vmatpush1.bf16.msra.mxu0 %v1212
    %1278 = vmatprep.subr.bf16.mxu0 %v1215
    %1279 = vmatpush1.bf16.msra.mxu0 %v1214
    %1280 = vmatprep.subr.bf16.mxu0 %v1217
    %1281 = vmatpush1.bf16.msra.mxu0 %v1216
    %1282 = vmatprep.subr.bf16.mxu0 %v1219
    %1283 = vmatpush1.bf16.msra.mxu0 %v1218
    %1284 = vmatprep.subr.bf16.mxu0 %v1221
    %1285 = vmatpush1.bf16.msra.mxu0 %v1220
    %1286 = vmatprep.subr.bf16.mxu0 %v1223
    %1287 = vmatpush1.bf16.msra.mxu0 %v1222
    %1288 = vmatprep.subr.bf16.mxu0 %v1225
    %1289 = vmatpush1.bf16.msra.mxu0 %v1224
    %1290 = vmatprep.subr.bf16.mxu0 %v1227
    %1291 = vmatpush1.bf16.msra.mxu0 %v1226
    %1292 = vmatprep.subr.bf16.mxu0 %v1229
    %1293 = vmatpush1.bf16.msra.mxu0 %v1228
    %1294 = vmatprep.subr.bf16.mxu0 %v1231
    %1295 = vmatpush1.bf16.msra.mxu0 %v1230
    %1296 = vmatprep.subr.bf16.mxu0 %v1233
    %1297 = vmatpush1.bf16.msra.mxu0 %v1232
    %1298 = vmatprep.subr.bf16.mxu0 %v1235
    %1299 = vmatpush1.bf16.msra.mxu0 %v1234
    %1300 = vmatprep.subr.bf16.mxu0 %v1237
    %1301 = vmatpush1.bf16.msra.mxu0 %v1236
    %1302 = vmatprep.subr.bf16.mxu0 %v1239
    %1303 = vmatpush1.bf16.msra.mxu0 %v1238
    %1304 = vmatprep.mubr.bf16.mxu0 %v1054
    %1305 = vmatmul.mubr.bf16.gmra.mrb[0].mxu0 %v1053
    %v1306 = vpop.f32.mrb[0].mxu0
    %v1307 = vadd.f32 %v1105, %v1306
    %v1308 = vpop.f32.mrb[0].mxu0
    %v1309 = vadd.f32 %v1109, %v1308
    %v1310 = vpop.f32.mrb[0].mxu0
    %v1311 = vadd.f32 %v1105, %v1310
    %v1312 = vpop.f32.mrb[0].mxu0
    %v1313 = vadd.f32 %v1109, %v1312
    %1314 = vmatprep.mubr.bf16.mxu0 %v1056
    %1315 = vmatmul.mubr.bf16.gmra.mrb[0].mxu0 %v1055
    %v1316 = vpop.f32.mrb[0].mxu0
    %v1317 = vadd.f32 %v1105, %v1316
    %v1318 = vpop.f32.mrb[0].mxu0
    %v1319 = vadd.f32 %v1109, %v1318
    %v1320 = vpop.f32.mrb[0].mxu0
    %v1321 = vadd.f32 %v1105, %v1320
    %v1322 = vpop.f32.mrb[0].mxu0
    %v1323 = vadd.f32 %v1109, %v1322
    %1324 = vmatprep.mubr.bf16.mxu0 %v1058
    %1325 = vmatmul.mubr.bf16.gmra.mrb[0].mxu0 %v1057
    %v1326 = vpop.f32.mrb[0].mxu0
    %v1327 = vadd.f32 %v1105, %v1326
    %v1328 = vpop.f32.mrb[0].mxu0
    %v1329 = vadd.f32 %v1109, %v1328
    %v1330 = vpop.f32.mrb[0].mxu0
    %v1331 = vadd.f32 %v1105, %v1330
    %v1332 = vpop.f32.mrb[0].mxu0
    %v1333 = vadd.f32 %v1109, %v1332
    %1334 = vmatprep.mubr.bf16.mxu0 %v1060
    %1335 = vmatmul.mubr.bf16.gmra.mrb[0].mxu0 %v1059
    %v1336 = vpop.f32.mrb[0].mxu0
    %v1337 = vadd.f32 %v1105, %v1336
    %v1338 = vpop.f32.mrb[0].mxu0
    %v1339 = vadd.f32 %v1109, %v1338
    %v1340 = vpop.f32.mrb[0].mxu0
    %v1341 = vadd.f32 %v1105, %v1340
    %v1342 = vpop.f32.mrb[0].mxu0
    %v1343 = vadd.f32 %v1109, %v1342
    %1344 = vmatprep.mubr.bf16.mxu0 %v1062
    %1345 = vmatmul.mubr.bf16.gmra.mrb[0].mxu0 %v1061
    %v1346 = vpop.f32.mrb[0].mxu0
    %v1347 = vadd.f32 %v1105, %v1346
    %v1348 = vpop.f32.mrb[0].mxu0
    %v1349 = vadd.f32 %v1109, %v1348
    %v1350 = vpop.f32.mrb[0].mxu0
    %v1351 = vadd.f32 %v1105, %v1350
    %v1352 = vpop.f32.mrb[0].mxu0
    %v1353 = vadd.f32 %v1109, %v1352
    %1354 = vmatprep.mubr.bf16.mxu0 %v1064
    %1355 = vmatmul.mubr.bf16.gmra.mrb[0].mxu0 %v1063
    %v1356 = vpop.f32.mrb[0].mxu0
    %v1357 = vadd.f32 %v1105, %v1356
    %v1358 = vpop.f32.mrb[0].mxu0
    %v1359 = vadd.f32 %v1109, %v1358
    %v1360 = vpop.f32.mrb[0].mxu0
    %v1361 = vadd.f32 %v1105, %v1360
    %v1362 = vpop.f32.mrb[0].mxu0
    %v1363 = vadd.f32 %v1109, %v1362
    %1364 = vmatprep.mubr.bf16.mxu0 %v1066
    %1365 = vmatmul.mubr.bf16.gmra.mrb[0].mxu0 %v1065
    %v1366 = vpop.f32.mrb[0].mxu0
    %v1367 = vadd.f32 %v1105, %v1366
    %v1368 = vpop.f32.mrb[0].mxu0
    %v1369 = vadd.f32 %v1109, %v1368
    %v1370 = vpop.f32.mrb[0].mxu0
    %v1371 = vadd.f32 %v1105, %v1370
    %v1372 = vpop.f32.mrb[0].mxu0
    %v1373 = vadd.f32 %v1109, %v1372
    %1374 = vmatprep.mubr.bf16.mxu0 %v1068
    %1375 = vmatmul.mubr.bf16.gmra.mrb[0].mxu0 %v1067
    %v1376 = vpop.f32.mrb[0].mxu0
    %v1377 = vadd.f32 %v1105, %v1376
    %v1378 = vpop.f32.mrb[0].mxu0
    %v1379 = vadd.f32 %v1109, %v1378
    %v1380 = vpop.f32.mrb[0].mxu0
    %v1381 = vadd.f32 %v1105, %v1380
    %v1382 = vpop.f32.mrb[0].mxu0
    %v1383 = vadd.f32 %v1109, %v1382
    %1384 = vdwg.mxu0
    %v1385 = vmax.f32 %v1307, 0.0
    %v1386 = vmax.f32 %v1309, 0.0
    %v1387 = vmax.f32 %v1311, 0.0
    %v1388 = vmax.f32 %v1313, 0.0
    %v1389 = vmax.f32 %v1317, 0.0
    %v1390 = vmax.f32 %v1319, 0.0
    %v1391 = vmax.f32 %v1321, 0.0
    %v1392 = vmax.f32 %v1323, 0.0
    %v1393 = vmax.f32 %v1327, 0.0
    %v1394 = vmax.f32 %v1329, 0.0
    %v1395 = vmax.f32 %v1331, 0.0
    %v1396 = vmax.f32 %v1333, 0.0
    %v1397 = vmax.f32 %v1337, 0.0
    %v1398 = vmax.f32 %v1339, 0.0
    %v1399 = vmax.f32 %v1341, 0.0
    %v1400 = vmax.f32 %v1343, 0.0
    %v1401 = vmax.f32 %v1347, 0.0
    %v1402 = vmax.f32 %v1349, 0.0
    %v1403 = vmax.f32 %v1351, 0.0
    %v1404 = vmax.f32 %v1353, 0.0
    %v1405 = vmax.f32 %v1357, 0.0
    %v1406 = vmax.f32 %v1359, 0.0
    %v1407 = vmax.f32 %v1361, 0.0
    %v1408 = vmax.f32 %v1363, 0.0
    %v1409 = vmax.f32 %v1367, 0.0
    %v1410 = vmax.f32 %v1369, 0.0
    %v1411 = vmax.f32 %v1371, 0.0
    %v1412 = vmax.f32 %v1373, 0.0
    %v1413 = vmax.f32 %v1377, 0.0
    %v1414 = vmax.f32 %v1379, 0.0
    %v1415 = vmax.f32 %v1381, 0.0
    %v1416 = vmax.f32 %v1383, 0.0
    %v1417 = vpack.c.bf16 %v1387, %v1385
    %v1418 = vpack.c.bf16 %v1388, %v1386
    %v1419 = vpack.c.bf16 %v1391, %v1389
    %v1420 = vpack.c.bf16 %v1392, %v1390
    %v1421 = vpack.c.bf16 %v1395, %v1393
    %v1422 = vpack.c.bf16 %v1396, %v1394
    %v1423 = vpack.c.bf16 %v1399, %v1397
    %v1424 = vpack.c.bf16 %v1400, %v1398
    %v1425 = vpack.c.bf16 %v1403, %v1401
    %v1426 = vpack.c.bf16 %v1404, %v1402
    %v1427 = vpack.c.bf16 %v1407, %v1405
    %v1428 = vpack.c.bf16 %v1408, %v1406
    %v1429 = vpack.c.bf16 %v1411, %v1409
    %v1430 = vpack.c.bf16 %v1412, %v1410
    %v1431 = vpack.c.bf16 %v1415, %v1413
    %v1432 = vpack.c.bf16 %v1416, %v1414
    %v1433 = vld [vmem:[%s6] sm:$0xf]
    %v1434 = vld [vmem:[%s6 + $0x4] sm:$0xf]
    %v1435 = vld [vmem:[%s6 + $0x8] sm:$0xf]
    %v1436 = vld [vmem:[%s6 + $0xc] sm:$0xf]
    %v1437 = vld [vmem:[%s6 + $0x10] sm:$0xf]
    %v1438 = vld [vmem:[%s6 + $0x14] sm:$0xf]
    %v1439 = vld [vmem:[%s6 + $0x18] sm:$0xf]
    %v1440 = vld [vmem:[%s6 + $0x1c] sm:$0xf]
    %v1441 = vld [vmem:[%s6 + $0x20] sm:$0xf]
    %v1442 = vld [vmem:[%s6 + $0x24] sm:$0xf]
    %v1443 = vld [vmem:[%s6 + $0x28] sm:$0xf]
    %v1444 = vld [vmem:[%s6 + $0x2c] sm:$0xf]
    %v1445 = vld [vmem:[%s6 + $0x30] sm:$0xf]
    %v1446 = vld [vmem:[%s6 + $0x34] sm:$0xf]
    %v1447 = vld [vmem:[%s6 + $0x38] sm:$0xf]
    %v1448 = vld [vmem:[%s6 + $0x3c] sm:$0xf]
    %v1449 = vld [vmem:[%s6 + $0x40] sm:$0xf]
    %v1450 = vld [vmem:[%s6 + $0x44] sm:$0xf]
    %v1451 = vld [vmem:[%s6 + $0x48] sm:$0xf]
    %v1452 = vld [vmem:[%s6 + $0x4c] sm:$0xf]
    %v1453 = vld [vmem:[%s6 + $0x50] sm:$0xf]
    %v1454 = vld [vmem:[%s6 + $0x54] sm:$0xf]
    %v1455 = vld [vmem:[%s6 + $0x58] sm:$0xf]
    %v1456 = vld [vmem:[%s6 + $0x5c] sm:$0xf]
    %v1457 = vld [vmem:[%s6 + $0x60] sm:$0xf]
    %v1458 = vld [vmem:[%s6 + $0x64] sm:$0xf]
    %v1459 = vld [vmem:[%s6 + $0x68] sm:$0xf]
    %v1460 = vld [vmem:[%s6 + $0x6c] sm:$0xf]
    %v1461 = vld [vmem:[%s6 + $0x70] sm:$0xf]
    %v1462 = vld [vmem:[%s6 + $0x74] sm:$0xf]
    %v1463 = vld [vmem:[%s6 + $0x78] sm:$0xf]
    %v1464 = vld [vmem:[%s6 + $0x7c] sm:$0xf]
    %v1497 = vunpack.c.l.b16 %v1433
    %v1498 = vunpack.c.l.b16 %v1434
    %v1499 = vunpack.c.l.b16 %v1435
    %v1500 = vunpack.c.l.b16 %v1436
    %v1501 = vunpack.c.l.b16 %v1437
    %v1502 = vunpack.c.l.b16 %v1438
    %v1503 = vunpack.c.l.b16 %v1439
    %v1504 = vunpack.c.l.b16 %v1440
    %v1505 = vunpack.c.l.b16 %v1441
    %v1506 = vunpack.c.l.b16 %v1442
    %v1507 = vunpack.c.l.b16 %v1443
    %v1508 = vunpack.c.l.b16 %v1444
    %v1509 = vunpack.c.l.b16 %v1445
    %v1510 = vunpack.c.l.b16 %v1446
    %v1511 = vunpack.c.l.b16 %v1447
    %v1512 = vunpack.c.l.b16 %v1448
    %v1513 = vunpack.c.l.b16 %v1449
    %v1514 = vunpack.c.l.b16 %v1450
    %v1515 = vunpack.c.l.b16 %v1451
    %v1516 = vunpack.c.l.b16 %v1452
    %v1517 = vunpack.c.l.b16 %v1453
    %v1518 = vunpack.c.l.b16 %v1454
    %v1519 = vunpack.c.l.b16 %v1455
    %v1520 = vunpack.c.l.b16 %v1456
    %v1521 = vunpack.c.l.b16 %v1457
    %v1522 = vunpack.c.l.b16 %v1458
    %v1523 = vunpack.c.l.b16 %v1459
    %v1524 = vunpack.c.l.b16 %v1460
    %v1525 = vunpack.c.l.b16 %v1461
    %v1526 = vunpack.c.l.b16 %v1462
    %v1527 = vunpack.c.l.b16 %v1463
    %v1528 = vunpack.c.l.b16 %v1464
    %v1529 = vpack.c.b16 %v1498, %v1497
    %v1530 = vpack.c.b16 %v1500, %v1499
    %v1531 = vpack.c.b16 %v1502, %v1501
    %v1532 = vpack.c.b16 %v1504, %v1503
    %v1533 = vpack.c.b16 %v1506, %v1505
    %v1534 = vpack.c.b16 %v1508, %v1507
    %v1535 = vpack.c.b16 %v1510, %v1509
    %v1536 = vpack.c.b16 %v1512, %v1511
    %v1537 = vpack.c.b16 %v1514, %v1513
    %v1538 = vpack.c.b16 %v1516, %v1515
    %v1539 = vpack.c.b16 %v1518, %v1517
    %v1540 = vpack.c.b16 %v1520, %v1519
    %v1541 = vpack.c.b16 %v1522, %v1521
    %v1542 = vpack.c.b16 %v1524, %v1523
    %v1543 = vpack.c.b16 %v1526, %v1525
    %v1544 = vpack.c.b16 %v1528, %v1527
    %1561 = vmatprep.subr.bf16.mxu0 0
    %1562 = vmatpush1.bf16.msra.mxu0 %v1529
    %1563 = vmatprep.subr.bf16.mxu0 0
    %1564 = vmatpush1.bf16.msra.mxu0 %v1530
    %1565 = vmatprep.subr.bf16.mxu0 0
    %1566 = vmatpush1.bf16.msra.mxu0 %v1531
    %1567 = vmatprep.subr.bf16.mxu0 0
    %1568 = vmatpush1.bf16.msra.mxu0 %v1532
    %1569 = vmatprep.subr.bf16.mxu0 0
    %1570 = vmatpush1.bf16.msra.mxu0 %v1533
    %1571 = vmatprep.subr.bf16.mxu0 0
    %1572 = vmatpush1.bf16.msra.mxu0 %v1534
    %1573 = vmatprep.subr.bf16.mxu0 0
    %1574 = vmatpush1.bf16.msra.mxu0 %v1535
    %1575 = vmatprep.subr.bf16.mxu0 0
    %1576 = vmatpush1.bf16.msra.mxu0 %v1536
    %1577 = vmatprep.subr.bf16.mxu0 0
    %1578 = vmatpush1.bf16.msra.mxu0 %v1537
    %1579 = vmatprep.subr.bf16.mxu0 0
    %1580 = vmatpush1.bf16.msra.mxu0 %v1538
    %1581 = vmatprep.subr.bf16.mxu0 0
    %1582 = vmatpush1.bf16.msra.mxu0 %v1539
    %1583 = vmatprep.subr.bf16.mxu0 0
    %1584 = vmatpush1.bf16.msra.mxu0 %v1540
    %1585 = vmatprep.subr.bf16.mxu0 0
    %1586 = vmatpush1.bf16.msra.mxu0 %v1541
    %1587 = vmatprep.subr.bf16.mxu0 0
    %1588 = vmatpush1.bf16.msra.mxu0 %v1542
    %1589 = vmatprep.subr.bf16.mxu0 0
    %1590 = vmatpush1.bf16.msra.mxu0 %v1543
    %1591 = vmatprep.subr.bf16.mxu0 0
    %1592 = vmatpush1.bf16.msra.mxu0 %v1544
    %1593 = vmatprep.mubr.bf16.mxu0 %v1418
    %1594 = vmatmul.mubr.bf16.gmra.mrb[0].mxu0 %v1417
    %v1595 = vpop.f32.mrb[0].mxu0
    %v1596 = vadd.f32 %v96, %v1595
    %v1597 = vpop.f32.mrb[0].mxu0
    %v1598 = vpop.f32.mrb[0].mxu0
    %v1599 = vadd.f32 %v96, %v1598
    %v1600 = vpop.f32.mrb[0].mxu0
    %1601 = vmatprep.mubr.bf16.mxu0 %v1420
    %1602 = vmatmul.mubr.bf16.gmra.mrb[0].mxu0 %v1419
    %v1603 = vpop.f32.mrb[0].mxu0
    %v1604 = vadd.f32 %v96, %v1603
    %v1605 = vpop.f32.mrb[0].mxu0
    %v1606 = vpop.f32.mrb[0].mxu0
    %v1607 = vadd.f32 %v96, %v1606
    %v1608 = vpop.f32.mrb[0].mxu0
    %1609 = vmatprep.mubr.bf16.mxu0 %v1422
    %1610 = vmatmul.mubr.bf16.gmra.mrb[0].mxu0 %v1421
    %v1611 = vpop.f32.mrb[0].mxu0
    %v1612 = vadd.f32 %v96, %v1611
    %v1613 = vpop.f32.mrb[0].mxu0
    %v1614 = vpop.f32.mrb[0].mxu0
    %v1615 = vadd.f32 %v96, %v1614
    %v1616 = vpop.f32.mrb[0].mxu0
    %1617 = vmatprep.mubr.bf16.mxu0 %v1424
    %1618 = vmatmul.mubr.bf16.gmra.mrb[0].mxu0 %v1423
    %v1619 = vpop.f32.mrb[0].mxu0
    %v1620 = vadd.f32 %v96, %v1619
    %v1621 = vpop.f32.mrb[0].mxu0
    %v1622 = vpop.f32.mrb[0].mxu0
    %v1623 = vadd.f32 %v96, %v1622
    %v1624 = vpop.f32.mrb[0].mxu0
    %1625 = vmatprep.mubr.bf16.mxu0 %v1426
    %1626 = vmatmul.mubr.bf16.gmra.mrb[0].mxu0 %v1425
    %v1627 = vpop.f32.mrb[0].mxu0
    %v1628 = vadd.f32 %v96, %v1627
    %v1629 = vpop.f32.mrb[0].mxu0
    %v1630 = vpop.f32.mrb[0].mxu0
    %v1631 = vadd.f32 %v96, %v1630
    %v1632 = vpop.f32.mrb[0].mxu0
    %1633 = vmatprep.mubr.bf16.mxu0 %v1428
    %1634 = vmatmul.mubr.bf16.gmra.mrb[0].mxu0 %v1427
    %v1635 = vpop.f32.mrb[0].mxu0
    %v1636 = vadd.f32 %v96, %v1635
    %v1637 = vpop.f32.mrb[0].mxu0
    %v1638 = vpop.f32.mrb[0].mxu0
    %v1639 = vadd.f32 %v96, %v1638
    %v1640 = vpop.f32.mrb[0].mxu0
    %1641 = vmatprep.mubr.bf16.mxu0 %v1430
    %1642 = vmatmul.mubr.bf16.gmra.mrb[0].mxu0 %v1429
    %v1643 = vpop.f32.mrb[0].mxu0
    %v1644 = vadd.f32 %v96, %v1643
    %v1645 = vpop.f32.mrb[0].mxu0
    %v1646 = vpop.f32.mrb[0].mxu0
    %v1647 = vadd.f32 %v96, %v1646
    %v1648 = vpop.f32.mrb[0].mxu0
    %1649 = vmatprep.mubr.bf16.mxu0 %v1432
    %1650 = vmatmul.mubr.bf16.gmra.mrb[0].mxu0 %v1431
    %v1651 = vpop.f32.mrb[0].mxu0
    %v1652 = vadd.f32 %v96, %v1651
    %v1653 = vpop.f32.mrb[0].mxu0
    %v1654 = vpop.f32.mrb[0].mxu0
    %v1655 = vadd.f32 %v96, %v1654
    %v1656 = vpop.f32.mrb[0].mxu0
    %1657 = vdwg.mxu0
    %v1658 = vmax.f32 %v1596, 0.0
    %v1659 = vmax.f32 %v1599, 0.0
    %v1660 = vmax.f32 %v1604, 0.0
    %v1661 = vmax.f32 %v1607, 0.0
    %v1662 = vmax.f32 %v1612, 0.0
    %v1663 = vmax.f32 %v1615, 0.0
    %v1664 = vmax.f32 %v1620, 0.0
    %v1665 = vmax.f32 %v1623, 0.0
    %v1666 = vmax.f32 %v1628, 0.0
    %v1667 = vmax.f32 %v1631, 0.0
    %v1668 = vmax.f32 %v1636, 0.0
    %v1669 = vmax.f32 %v1639, 0.0
    %v1670 = vmax.f32 %v1644, 0.0
    %v1671 = vmax.f32 %v1647, 0.0
    %v1672 = vmax.f32 %v1652, 0.0
    %v1673 = vmax.f32 %v1655, 0.0
    %v1674 = vld [vmem:[%s7] sm:$0x1]
    %v1675 = vpack.c.bf16 %v1659, %v1658
    %v1676 = vpack.c.bf16 %v1661, %v1660
    %v1677 = vpack.c.bf16 %v1663, %v1662
    %v1678 = vpack.c.bf16 %v1665, %v1664
    %v1679 = vpack.c.bf16 %v1667, %v1666
    %v1680 = vpack.c.bf16 %v1669, %v1668
    %v1681 = vpack.c.bf16 %v1671, %v1670
    %v1682 = vpack.c.bf16 %v1673, %v1672
    %1684 = vset.pattern.permute.xlu0 0
    %1685 = vperm.xlu0 %1684, %v97
    %v1686 = vpop.permute.xlu0 %1685
    %1688 = vmatprep.subr.bf16.mxu0 0
    %1689 = vmatpush1.bf16.xpose.msra.mxu0 %v1675
    %1690 = vmatprep.subr.bf16.mxu0 0
    %1691 = vmatpush1.bf16.xpose.msra.mxu0 %v1676
    %1692 = vmatprep.subr.bf16.mxu0 0
    %1693 = vmatpush1.bf16.xpose.msra.mxu0 %v1677
    %1694 = vmatprep.subr.bf16.mxu0 0
    %1695 = vmatpush1.bf16.xpose.msra.mxu0 %v1678
    %1696 = vmatprep.subr.bf16.mxu0 0
    %1697 = vmatpush1.bf16.xpose.msra.mxu0 %v1679
    %1698 = vmatprep.subr.bf16.mxu0 0
    %1699 = vmatpush1.bf16.xpose.msra.mxu0 %v1680
    %1700 = vmatprep.subr.bf16.mxu0 0
    %1701 = vmatpush1.bf16.xpose.msra.mxu0 %v1681
    %1702 = vmatprep.subr.bf16.mxu0 0
    %1703 = vmatpush1.bf16.xpose.msra.mxu0 %v1682
    %1704 = vmatprep.subr.bf16.mxu0 0
    %1705 = vmatpush1.bf16.xpose.msra.mxu0 0
    %1706 = vmatprep.subr.bf16.mxu0 0
    %1707 = vmatpush1.bf16.xpose.msra.mxu0 0
    %1708 = vmatprep.subr.bf16.mxu0 0
    %1709 = vmatpush1.bf16.xpose.msra.mxu0 0
    %1710 = vmatprep.subr.bf16.mxu0 0
    %1711 = vmatpush1.bf16.xpose.msra.mxu0 0
    %1712 = vmatprep.subr.bf16.mxu0 0
    %1713 = vmatpush1.bf16.xpose.msra.mxu0 0
    %1714 = vmatprep.subr.bf16.mxu0 0
    %1715 = vmatpush1.bf16.xpose.msra.mxu0 0
    %1716 = vmatprep.subr.bf16.mxu0 0
    %1717 = vmatpush1.bf16.xpose.msra.mxu0 0
    %1718 = vmatprep.subr.bf16.mxu0 0
    %1719 = vmatpush1.bf16.xpose.msra.mxu0 0
    %1720 = vmatprep.mubr.bf16.mxu0 0
    %1721 = vmatmul.mubr.bf16.gmra.mrb[0].mxu0 %v1674
    %v1722 = vpop.f32.mrb[0].mxu0
    %v1723 = vadd.f32 %v1686, %v1722
    %v1724 = vpop.f32.mrb[0].mxu0
    %v1725 = vpop.f32.mrb[0].mxu0
    %v1726 = vpop.f32.mrb[0].mxu0
    %1727 = vdwg.mxu0
    %1728 = vst [vmem:[#allocation10] sm:$0x1] %v1723
    // Predicated region
    $region54: #{tpu_custom_call.1} parent=1 // pred_check
      _
    $region55: #{tpu_custom_call.1} parent=1 // pred_check_branch
      %1730 = sbr.rel (0) target = $region57
    $region56: #{tpu_custom_call.1} parent=1 // pred_region
      %s1732 = ssub.s32 16, 16
      %1733 = vsyncadd [#allocation4], %s1732
      %s1735 = sshll.u32 [#allocation10], 4
      %s1736 = int_to_ptr.vmem [resolvable:$true] %s1735
      %1738 = dma.vmem_to_hbm [thread:$0]  %s1736, 16, %s9, [#allocation4]
    $region57: #{tpu_custom_call.1} parent=1 // pred_fallthru
      _
    // Predicated region
    $region58: #{tpu_custom_call.1} parent=1 // pred_check
      _
    $region59: #{tpu_custom_call.1} parent=1 // pred_check_branch
      %1740 = sbr.rel (0) target = $region61
    $region60: #{tpu_custom_call.1} parent=1 // pred_region
      %1741 = dma.done [#allocation4], 16
    $region61: #{tpu_custom_call.1} parent=1 // pred_fallthru
      _
    %1742 = vsyncpa [#allocation3], 1
    %1743 = vsyncpa [#allocation6], 1
    %1744 = vsyncpa [#allocation9], 1
    %1745 = vsyncpa [#allocation4], 1

</llo_original>
